<compile_context>
chip_gen: v7x
topology: tpu7x:2x2x1
jax: 0.10.0
libtpu: 0.0.40
codegen_flags: <defaults>
</compile_context>

<pallas_src>
import numpy as np
import jax
import jax.numpy as jnp
from jax.experimental import pallas as pl
from jax.experimental.pallas import tpu as pltpu


def _round_up(a, b):
    return (a + b - 1) // b * b


# --------------------------- fused forward kernel ---------------------------
def fused_tree_lstm_kernel(node_ids_ref, child_ids_ref,            # SMEM (scalar prefetch)
                           x_ref, c0_ref, rowscale_ref,
                           w_iou_ref, b_iou_ref, u_iou_ref, u_f_w_ref, u_f_b_ref,
                           w_lin_ref, b_lin_ref,
                           out_ref,
                           h_state, c_state, hk_buf, ck_buf):
    l = pl.program_id(0)                      # internal-level index (leaves-first)
    H = u_f_w_ref.shape[0]
    M = node_ids_ref.shape[1]                 # padded nodes per level
    K = child_ids_ref.shape[1] // M           # padded children per node
    zero_row = h_state.shape[0] - 2           # always-zero gather row (missing child)
    f32, bf16 = jnp.float32, jnp.bfloat16

    b_iou = b_iou_ref[...]

    # ---- grid step 0: W_iou projection + leaf apply for every row. ----
    # Internal rows are overwritten before any parent reads them (topological
    # order), so this single batched matmul replaces the whole leaf-level pass.
    @pl.when(l == 0)
    def _leaf_init():
        iou = jnp.dot(x_ref[...], w_iou_ref[...],
                      preferred_element_type=f32) + b_iou
        i_g = jax.nn.sigmoid(iou[:, 0:H])
        o_g = jax.nn.sigmoid(iou[:, H:2 * H])
        u_g = jnp.tanh(iou[:, 2 * H:3 * H])
        c = i_g * u_g + c0_ref[...]
        c_state[...] = c
        h_state[...] = o_g * jnp.tanh(c)
        # Zero the gather-dummy row so missing-child gathers contribute nothing.
        h_state[pl.ds(zero_row, 1), :] = jnp.zeros((1, H), f32)
        c_state[pl.ds(zero_row, 1), :] = jnp.zeros((1, H), f32)

    # ---- every grid step: one internal level (ChildSum reduce + apply). ----
    # Gather all K children of every node into one [K*M, H] slab (row k*M+m is
    # the k-th child of node-slot m).  Missing children read the zero row.
    for k in range(K):
        for m in range(M):
            cid = child_ids_ref[l, m * K + k]
            hk_buf[pl.ds(k * M + m, 1), :] = h_state[pl.ds(cid, 1), :]
            ck_buf[pl.ds(k * M + m, 1), :] = c_state[pl.ds(cid, 1), :]
    hk_all = hk_buf[...]
    ck_all = ck_buf[...]
    # Single U_f matmul over all K*M child rows (instead of K small matmuls).
    f_all = jax.nn.sigmoid(jnp.dot(hk_all.astype(bf16), u_f_w_ref[...],
                                   preferred_element_type=f32) + u_f_b_ref[...])
    fc_all = f_all * ck_all
    h_tild = jnp.zeros((M, H), f32)
    c_sum = jnp.zeros((M, H), f32)
    for k in range(K):                        # static, sublane-aligned slices
        h_tild = h_tild + hk_all[k * M:(k + 1) * M, :]
        c_sum = c_sum + fc_all[k * M:(k + 1) * M, :]

    iou = jnp.dot(h_tild.astype(bf16), u_iou_ref[...],
                  preferred_element_type=f32) + b_iou
    i_g = jax.nn.sigmoid(iou[:, 0:H])
    o_g = jax.nn.sigmoid(iou[:, H:2 * H])
    u_g = jnp.tanh(iou[:, 2 * H:3 * H])
    c_new = i_g * u_g + c_sum
    h_new = o_g * jnp.tanh(c_new)
    for m in range(M):                        # scatter back to resident state
        nid = node_ids_ref[l, m]              # padded slots write the sink row
        h_state[pl.ds(nid, 1), :] = h_new[m:m + 1, :]
        c_state[pl.ds(nid, 1), :] = c_new[m:m + 1, :]

    # ---- last grid step: AvgPooling + linear head + log_softmax. ----
    @pl.when(l == pl.num_programs(0) - 1)
    def _head():
        # rowscale = 1/N on real rows, 0 on padding -> masked mean in one pass.
        h_mean = jnp.sum(h_state[...] * rowscale_ref[...], axis=0, keepdims=True)
        logits = jnp.dot(h_mean.astype(bf16), w_lin_ref[...],
                         preferred_element_type=f32) + b_lin_ref[...]
        mx = jnp.max(logits, axis=-1, keepdims=True)
        z = logits - mx
        lse = jnp.log(jnp.sum(jnp.exp(z), axis=-1, keepdims=True))
        out_ref[...] = z - lse


# --------------------------------- wrapper ---------------------------------
def tree_lstm_forward(embeds, h0, c0, internal_levels, params, num_classes):
    # h0 kept for interface parity with the module but is mathematically unused:
    # every node's h is overwritten before it is ever read (dgl topo propagation).
    del h0
    N, x_size = embeds.shape
    H = c0.shape[1]
    L_int = len(internal_levels)
    K = max(len(ch) for _, chs in internal_levels for ch in chs)
    M_max = _round_up(max(len(nodes) for nodes, _ in internal_levels), 8)
    N_pad = _round_up(N + 2, 8)               # +2 dummy rows (zero-gather + scatter-sink)
    ZERO_ROW = N_pad - 2                      # always zero, only ever read
    SINK_ROW = N_pad - 1                      # write sink for padded node slots
    C_pad = _round_up(num_classes, 128)       # lane-dense head output
    f32, bf16 = jnp.float32, jnp.bfloat16

    # Per-level index tables (SMEM scalar prefetch).
    node_ids = np.full((L_int, M_max), SINK_ROW, np.int32)
    child_ids = np.full((L_int, M_max, K), ZERO_ROW, np.int32)
    for li, (nodes, chs) in enumerate(internal_levels):
        for m, nid in enumerate(nodes):
            node_ids[li, m] = nid
            for k, cid in enumerate(chs[m]):
                child_ids[li, m, k] = cid
    child_ids = child_ids.reshape(L_int, M_max * K)

    # Padded / lane-dense tensors.  Matmul operands in bf16 (f32 accumulate in-kernel).
    x_p = jnp.zeros((N_pad, x_size), f32).at[:N].set(embeds).astype(bf16)
    c0_p = jnp.zeros((N_pad, H), f32).at[:N].set(c0)
    rowscale = jnp.zeros((N_pad, 1), f32).at[:N].set(1.0 / N)
    w_lin_p = jnp.zeros((H, C_pad), f32).at[:, :num_classes].set(params["w_lin"]).astype(bf16)
    b_lin_p = jnp.full((1, C_pad), -1e30, f32).at[:, :num_classes].set(params["b_lin"])

    grid_spec = pltpu.PrefetchScalarGridSpec(
        num_scalar_prefetch=2,
        grid=(L_int,),
        in_specs=[
            pl.BlockSpec((N_pad, x_size), lambda l, *_: (0, 0)),
            pl.BlockSpec((N_pad, H), lambda l, *_: (0, 0)),
            pl.BlockSpec((N_pad, 1), lambda l, *_: (0, 0)),
            pl.BlockSpec((x_size, 3 * H), lambda l, *_: (0, 0)),
            pl.BlockSpec((1, 3 * H), lambda l, *_: (0, 0)),
            pl.BlockSpec((H, 3 * H), lambda l, *_: (0, 0)),
            pl.BlockSpec((H, H), lambda l, *_: (0, 0)),
            pl.BlockSpec((1, H), lambda l, *_: (0, 0)),
            pl.BlockSpec((H, C_pad), lambda l, *_: (0, 0)),
            pl.BlockSpec((1, C_pad), lambda l, *_: (0, 0)),
        ],
        out_specs=pl.BlockSpec((1, C_pad), lambda l, *_: (0, 0)),
        scratch_shapes=[
            pltpu.VMEM((N_pad, H), jnp.float32),       # resident h state
            pltpu.VMEM((N_pad, H), jnp.float32),       # resident c state
            pltpu.VMEM((K * M_max, H), jnp.float32),   # child-h gather slab
            pltpu.VMEM((K * M_max, H), jnp.float32),   # child-c gather slab
        ],
    )
    out = pl.pallas_call(
        fused_tree_lstm_kernel,
        out_shape=jax.ShapeDtypeStruct((1, C_pad), jnp.float32),
        grid_spec=grid_spec,
        compiler_params=pltpu.CompilerParams(dimension_semantics=("arbitrary",)),
    )(jnp.asarray(node_ids), jnp.asarray(child_ids),
      x_p, c0_p, rowscale,
      params["w_iou"].astype(bf16), params["b_iou"],
      params["u_iou"].astype(bf16), params["u_f_w"].astype(bf16), params["u_f_b"],
      w_lin_p, b_lin_p)
    return out[:, :num_classes]


# ---------------------------- pure-JAX reference ----------------------------
def ref_forward(embeds, h0, c0, levels, params, num_classes):
    # Module semantics, level-by-level with masks; matmul operands mirrored in bf16
    # (f32 accumulation) so the comparison against the kernel is tight.
    H = c0.shape[1]
    bf = lambda a: a.astype(jnp.bfloat16)
    mm = lambda a, b: jnp.dot(bf(a), bf(b), preferred_element_type=jnp.float32)
    iou_x = mm(embeds, params["w_iou"])
    h_state, c_state = h0, c0
    for nodes, child_idx, kid_mask, leaf_mask in levels:
        hk = h_state[child_idx] * kid_mask
        ck = c_state[child_idx] * kid_mask
        h_tild = hk.sum(1)
        f = jax.nn.sigmoid(jnp.einsum("mkh,hg->mkg", bf(hk), bf(params["u_f_w"]),
                                      preferred_element_type=jnp.float32) + params["u_f_b"])
        c_sum = (f * ck).sum(1)
        iou = (leaf_mask * iou_x[nodes]
               + (1.0 - leaf_mask) * mm(h_tild, params["u_iou"]) + params["b_iou"])
        i = jax.nn.sigmoid(iou[:, :H])
        o = jax.nn.sigmoid(iou[:, H:2 * H])
        u = jnp.tanh(iou[:, 2 * H:])
        c_base = leaf_mask * c0[nodes] + (1.0 - leaf_mask) * c_sum
        c = i * u + c_base
        h = o * jnp.tanh(c)
        h_state = h_state.at[nodes].set(h)
        c_state = c_state.at[nodes].set(c)
    hm = h_state.mean(0, keepdims=True)
    logits = mm(hm, params["w_lin"]) + params["b_lin"]
    return jax.nn.log_softmax(logits, axis=1)


if __name__ == "__main__":
    x_size, h_size, num_classes = 128, 128, 5          # lane-dense hidden size
    N, K = 15, 2
    # Complete binary tree: node i has children (2i+1, 2i+2) for i in 0..6; leaves 7..14.
    internal_levels = [
        ([3, 4, 5, 6], [[7, 8], [9, 10], [11, 12], [13, 14]]),
        ([1, 2], [[3, 4], [5, 6]]),
        ([0], [[1, 2]]),
    ]
    leaf_nodes = list(range(7, 15))

    key = jax.random.PRNGKey(0)
    k = jax.random.split(key, 8)
    params = {
        # nn.Linear weights, pre-transposed to [in, out]
        "w_iou": 0.1 * jax.random.normal(k[0], (x_size, 3 * h_size), jnp.float32),
        "u_iou": 0.1 * jax.random.normal(k[1], (h_size, 3 * h_size), jnp.float32),
        "b_iou": jnp.zeros((1, 3 * h_size), jnp.float32),       # module inits zeros
        "u_f_w": 0.1 * jax.random.normal(k[2], (h_size, h_size), jnp.float32),
        "u_f_b": 0.1 * jax.random.normal(k[3], (1, h_size), jnp.float32),
        "w_lin": 0.1 * jax.random.normal(k[4], (h_size, num_classes), jnp.float32),
        "b_lin": 0.1 * jax.random.normal(k[5], (1, num_classes), jnp.float32),
    }
    embeds = jax.random.normal(k[6], (N, x_size), jnp.float32)
    h0 = jnp.zeros((N, h_size), jnp.float32)
    c0 = jnp.zeros((N, h_size), jnp.float32)

    # Reference level structure (leaves first, with masks) — module semantics.
    levels_ref = [(jnp.array(leaf_nodes, jnp.int32),
                   jnp.zeros((len(leaf_nodes), K), jnp.int32),
                   jnp.zeros((len(leaf_nodes), K, 1), jnp.float32),
                   jnp.ones((len(leaf_nodes), 1), jnp.float32))]
    for nodes, chs in internal_levels:
        levels_ref.append((jnp.array(nodes, jnp.int32),
                           jnp.array(chs, jnp.int32),
                           jnp.ones((len(nodes), K, 1), jnp.float32),
                           jnp.zeros((len(nodes), 1), jnp.float32)))

    logits = tree_lstm_forward(embeds, h0, c0, internal_levels, params, num_classes)
    logits = jax.block_until_ready(logits)

    ref = ref_forward(embeds, h0, c0, levels_ref, params, num_classes)
    ref = jax.block_until_ready(ref)

    assert logits.shape == (1, num_classes)
    assert jnp.allclose(logits, ref, atol=5e-3, rtol=5e-3), (logits, ref)

    print("KERNEL_OK")
</pallas_src>

<mosaic_0001>
module attributes {stable_mosaic.version = 11 : i64} {
  func.func @fused_tree_lstm_kernel(%arg0: i32, %arg1: memref<3x8xi32, #tpu.memory_space<smem>>, %arg2: memref<3x16xi32, #tpu.memory_space<smem>>, %arg3: memref<24x128xbf16, #tpu.memory_space<vmem>>, %arg4: memref<24x128xf32, #tpu.memory_space<vmem>>, %arg5: memref<24x1xf32, #tpu.memory_space<vmem>>, %arg6: memref<128x384xbf16, #tpu.memory_space<vmem>>, %arg7: memref<1x384xf32, #tpu.memory_space<vmem>>, %arg8: memref<128x384xbf16, #tpu.memory_space<vmem>>, %arg9: memref<128x128xbf16, #tpu.memory_space<vmem>>, %arg10: memref<1x128xf32, #tpu.memory_space<vmem>>, %arg11: memref<128x128xbf16, #tpu.memory_space<vmem>>, %arg12: memref<1x128xf32, #tpu.memory_space<vmem>>, %arg13: memref<1x128xf32, #tpu.memory_space<vmem>>, %arg14: memref<24x128xf32, #tpu.memory_space<vmem>>, %arg15: memref<24x128xf32, #tpu.memory_space<vmem>>, %arg16: memref<16x128xf32, #tpu.memory_space<vmem>>, %arg17: memref<16x128xf32, #tpu.memory_space<vmem>>) attributes {dimension_semantics = [#tpu.dimension_semantics<arbitrary>], iteration_bounds = array<i64: 3>, scalar_prefetch = 2 : i64, scratch_operands = 4 : i64, tpu.core_type = #tpu.core_type<tc>, window_params = [{pipeline_mode = #tpu.pipeline_mode<synchronous>, transform_indices = @transform_0, window_bounds = array<i64: 24, 128>}, {pipeline_mode = #tpu.pipeline_mode<synchronous>, transform_indices = @transform_1, window_bounds = array<i64: 24, 128>}, {pipeline_mode = #tpu.pipeline_mode<synchronous>, transform_indices = @transform_2, window_bounds = array<i64: 24, 1>}, {pipeline_mode = #tpu.pipeline_mode<synchronous>, transform_indices = @transform_3, window_bounds = array<i64: 128, 384>}, {pipeline_mode = #tpu.pipeline_mode<synchronous>, transform_indices = @transform_4, window_bounds = array<i64: 1, 384>}, {pipeline_mode = #tpu.pipeline_mode<synchronous>, transform_indices = @transform_5, window_bounds = array<i64: 128, 384>}, {pipeline_mode = #tpu.pipeline_mode<synchronous>, transform_indices = @transform_6, window_bounds = array<i64: 128, 128>}, {pipeline_mode = #tpu.pipeline_mode<synchronous>, transform_indices = @transform_7, window_bounds = array<i64: 1, 128>}, {pipeline_mode = #tpu.pipeline_mode<synchronous>, transform_indices = @transform_8, window_bounds = array<i64: 128, 128>}, {pipeline_mode = #tpu.pipeline_mode<synchronous>, transform_indices = @transform_9, window_bounds = array<i64: 1, 128>}, {pipeline_mode = #tpu.pipeline_mode<synchronous>, transform_indices = @transform_10, window_bounds = array<i64: 1, 128>}]} {
    %c0 = arith.constant 0 : index
    %c0_0 = arith.constant 0 : index
    %0 = vector.load %arg7[%c0, %c0_0] : memref<1x384xf32, #tpu.memory_space<vmem>>, vector<1x384xf32>
    %c0_i32 = arith.constant 0 : i32
    %1 = arith.cmpi eq, %arg0, %c0_i32 : i32
    %2 = arith.extui %1 : i1 to i32
    %c0_i32_1 = arith.constant 0 : i32
    %3 = arith.cmpi ne, %2, %c0_i32_1 : i32
    scf.if %3 {
      %c0_140 = arith.constant 0 : index
      %c0_141 = arith.constant 0 : index
      %246 = vector.load %arg3[%c0_140, %c0_141] : memref<24x128xbf16, #tpu.memory_space<vmem>>, vector<24x128xbf16>
      %c0_142 = arith.constant 0 : index
      %c0_143 = arith.constant 0 : index
      %247 = vector.load %arg6[%c0_142, %c0_143] : memref<128x384xbf16, #tpu.memory_space<vmem>>, vector<128x384xbf16>
      %cst_144 = arith.constant dense<0.000000e+00> : vector<24x384xf32>
      %248 = tpu.matmul %246, %247, %cst_144 {dimension_numbers = #tpu.dot_dimension_numbers<[1], [0], [0], [1], [0, 0, 1, 1], [], []>} : vector<24x128xbf16>, vector<128x384xbf16>, vector<24x384xf32> -> vector<24x384xf32>
      %249 = vector.broadcast %0 : vector<1x384xf32> to vector<24x384xf32>
      %250 = arith.addf %248, %249 : vector<24x384xf32>
      %251 = vector.extract_strided_slice %250 {offsets = [0, 0], sizes = [24, 128], strides = [1, 1]} : vector<24x384xf32> to vector<24x128xf32>
      %252 = arith.negf %251 : vector<24x128xf32>
      %253 = math.exp %252 : vector<24x128xf32>
      %cst_145 = arith.constant 1.000000e+00 : f32
      %254 = vector.broadcast %cst_145 : f32 to vector<24x128xf32>
      %255 = arith.addf %254, %253 : vector<24x128xf32>
      %256 = arith.divf %254, %255 : vector<24x128xf32>
      %257 = vector.extract_strided_slice %250 {offsets = [0, 128], sizes = [24, 128], strides = [1, 1]} : vector<24x384xf32> to vector<24x128xf32>
      %258 = arith.negf %257 : vector<24x128xf32>
      %259 = math.exp %258 : vector<24x128xf32>
      %cst_146 = arith.constant 1.000000e+00 : f32
      %260 = vector.broadcast %cst_146 : f32 to vector<24x128xf32>
      %261 = arith.addf %260, %259 : vector<24x128xf32>
      %262 = arith.divf %260, %261 : vector<24x128xf32>
      %263 = vector.extract_strided_slice %250 {offsets = [0, 256], sizes = [24, 128], strides = [1, 1]} : vector<24x384xf32> to vector<24x128xf32>
      %264 = math.tanh %263 : vector<24x128xf32>
      %265 = arith.mulf %256, %264 : vector<24x128xf32>
      %c0_147 = arith.constant 0 : index
      %c0_148 = arith.constant 0 : index
      %266 = vector.load %arg4[%c0_147, %c0_148] : memref<24x128xf32, #tpu.memory_space<vmem>>, vector<24x128xf32>
      %267 = arith.addf %265, %266 : vector<24x128xf32>
      %c0_149 = arith.constant 0 : index
      %c0_150 = arith.constant 0 : index
      %268 = vector.load %arg15[%c0_149, %c0_150] : memref<24x128xf32, #tpu.memory_space<vmem>>, vector<24x128xf32>
      tpu.vector_store %arg15[%c0_149, %c0_150], %267 {strides = array<i32>} : memref<24x128xf32, #tpu.memory_space<vmem>>, vector<24x128xf32>,
      %269 = math.tanh %267 : vector<24x128xf32>
      %270 = arith.mulf %262, %269 : vector<24x128xf32>
      %c0_151 = arith.constant 0 : index
      %c0_152 = arith.constant 0 : index
      %271 = vector.load %arg14[%c0_151, %c0_152] : memref<24x128xf32, #tpu.memory_space<vmem>>, vector<24x128xf32>
      tpu.vector_store %arg14[%c0_151, %c0_152], %270 {strides = array<i32>} : memref<24x128xf32, #tpu.memory_space<vmem>>, vector<24x128xf32>,
      %cst_153 = arith.constant 0.000000e+00 : f32
      %272 = vector.broadcast %cst_153 : f32 to vector<1x128xf32>
      %c22 = arith.constant 22 : index
      %c0_154 = arith.constant 0 : index
      %273 = vector.load %arg14[%c22, %c0_154] : memref<24x128xf32, #tpu.memory_space<vmem>>, vector<1x128xf32>
      tpu.vector_store %arg14[%c22, %c0_154], %272 {strides = array<i32>} : memref<24x128xf32, #tpu.memory_space<vmem>>, vector<1x128xf32>,
      %cst_155 = arith.constant 0.000000e+00 : f32
      %274 = vector.broadcast %cst_155 : f32 to vector<1x128xf32>
      %c22_156 = arith.constant 22 : index
      %c0_157 = arith.constant 0 : index
      %275 = vector.load %arg15[%c22_156, %c0_157] : memref<24x128xf32, #tpu.memory_space<vmem>>, vector<1x128xf32>
      tpu.vector_store %arg15[%c22_156, %c0_157], %274 {strides = array<i32>} : memref<24x128xf32, #tpu.memory_space<vmem>>, vector<1x128xf32>,
    } else {
    }
    %4 = arith.index_cast %arg0 : i32 to index
    %c0_2 = arith.constant 0 : index
    %5 = memref.load %arg2[%4, %c0_2] : memref<3x16xi32, #tpu.memory_space<smem>>
    %6 = arith.index_cast %5 : i32 to index
    %c0_3 = arith.constant 0 : index
    %7 = vector.load %arg14[%6, %c0_3] : memref<24x128xf32, #tpu.memory_space<vmem>>, vector<1x128xf32>
    %c0_4 = arith.constant 0 : index
    %c0_5 = arith.constant 0 : index
    %8 = vector.load %arg16[%c0_4, %c0_5] : memref<16x128xf32, #tpu.memory_space<vmem>>, vector<1x128xf32>
    tpu.vector_store %arg16[%c0_4, %c0_5], %7 {strides = array<i32>} : memref<16x128xf32, #tpu.memory_space<vmem>>, vector<1x128xf32>,
    %9 = arith.index_cast %5 : i32 to index
    %c0_6 = arith.constant 0 : index
    %10 = vector.load %arg15[%9, %c0_6] : memref<24x128xf32, #tpu.memory_space<vmem>>, vector<1x128xf32>
    %c0_7 = arith.constant 0 : index
    %c0_8 = arith.constant 0 : index
    %11 = vector.load %arg17[%c0_7, %c0_8] : memref<16x128xf32, #tpu.memory_space<vmem>>, vector<1x128xf32>
    tpu.vector_store %arg17[%c0_7, %c0_8], %10 {strides = array<i32>} : memref<16x128xf32, #tpu.memory_space<vmem>>, vector<1x128xf32>,
    %12 = arith.index_cast %arg0 : i32 to index
    %c2 = arith.constant 2 : index
    %13 = memref.load %arg2[%12, %c2] : memref<3x16xi32, #tpu.memory_space<smem>>
    %14 = arith.index_cast %13 : i32 to index
    %c0_9 = arith.constant 0 : index
    %15 = vector.load %arg14[%14, %c0_9] : memref<24x128xf32, #tpu.memory_space<vmem>>, vector<1x128xf32>
    %c1 = arith.constant 1 : index
    %c0_10 = arith.constant 0 : index
    %16 = vector.load %arg16[%c1, %c0_10] : memref<16x128xf32, #tpu.memory_space<vmem>>, vector<1x128xf32>
    tpu.vector_store %arg16[%c1, %c0_10], %15 {strides = array<i32>} : memref<16x128xf32, #tpu.memory_space<vmem>>, vector<1x128xf32>,
    %17 = arith.index_cast %13 : i32 to index
    %c0_11 = arith.constant 0 : index
    %18 = vector.load %arg15[%17, %c0_11] : memref<24x128xf32, #tpu.memory_space<vmem>>, vector<1x128xf32>
    %c1_12 = arith.constant 1 : index
    %c0_13 = arith.constant 0 : index
    %19 = vector.load %arg17[%c1_12, %c0_13] : memref<16x128xf32, #tpu.memory_space<vmem>>, vector<1x128xf32>
    tpu.vector_store %arg17[%c1_12, %c0_13], %18 {strides = array<i32>} : memref<16x128xf32, #tpu.memory_space<vmem>>, vector<1x128xf32>,
    %20 = arith.index_cast %arg0 : i32 to index
    %c4 = arith.constant 4 : index
    %21 = memref.load %arg2[%20, %c4] : memref<3x16xi32, #tpu.memory_space<smem>>
    %22 = arith.index_cast %21 : i32 to index
    %c0_14 = arith.constant 0 : index
    %23 = vector.load %arg14[%22, %c0_14] : memref<24x128xf32, #tpu.memory_space<vmem>>, vector<1x128xf32>
    %c2_15 = arith.constant 2 : index
    %c0_16 = arith.constant 0 : index
    %24 = vector.load %arg16[%c2_15, %c0_16] : memref<16x128xf32, #tpu.memory_space<vmem>>, vector<1x128xf32>
    tpu.vector_store %arg16[%c2_15, %c0_16], %23 {strides = array<i32>} : memref<16x128xf32, #tpu.memory_space<vmem>>, vector<1x128xf32>,
    %25 = arith.index_cast %21 : i32 to index
    %c0_17 = arith.constant 0 : index
    %26 = vector.load %arg15[%25, %c0_17] : memref<24x128xf32, #tpu.memory_space<vmem>>, vector<1x128xf32>
    %c2_18 = arith.constant 2 : index
    %c0_19 = arith.constant 0 : index
    %27 = vector.load %arg17[%c2_18, %c0_19] : memref<16x128xf32, #tpu.memory_space<vmem>>, vector<1x128xf32>
    tpu.vector_store %arg17[%c2_18, %c0_19], %26 {strides = array<i32>} : memref<16x128xf32, #tpu.memory_space<vmem>>, vector<1x128xf32>,
    %28 = arith.index_cast %arg0 : i32 to index
    %c6 = arith.constant 6 : index
    %29 = memref.load %arg2[%28, %c6] : memref<3x16xi32, #tpu.memory_space<smem>>
    %30 = arith.index_cast %29 : i32 to index
    %c0_20 = arith.constant 0 : index
    %31 = vector.load %arg14[%30, %c0_20] : memref<24x128xf32, #tpu.memory_space<vmem>>, vector<1x128xf32>
    %c3 = arith.constant 3 : index
    %c0_21 = arith.constant 0 : index
    %32 = vector.load %arg16[%c3, %c0_21] : memref<16x128xf32, #tpu.memory_space<vmem>>, vector<1x128xf32>
    tpu.vector_store %arg16[%c3, %c0_21], %31 {strides = array<i32>} : memref<16x128xf32, #tpu.memory_space<vmem>>, vector<1x128xf32>,
    %33 = arith.index_cast %29 : i32 to index
    %c0_22 = arith.constant 0 : index
    %34 = vector.load %arg15[%33, %c0_22] : memref<24x128xf32, #tpu.memory_space<vmem>>, vector<1x128xf32>
    %c3_23 = arith.constant 3 : index
    %c0_24 = arith.constant 0 : index
    %35 = vector.load %arg17[%c3_23, %c0_24] : memref<16x128xf32, #tpu.memory_space<vmem>>, vector<1x128xf32>
    tpu.vector_store %arg17[%c3_23, %c0_24], %34 {strides = array<i32>} : memref<16x128xf32, #tpu.memory_space<vmem>>, vector<1x128xf32>,
    %36 = arith.index_cast %arg0 : i32 to index
    %c8 = arith.constant 8 : index
    %37 = memref.load %arg2[%36, %c8] : memref<3x16xi32, #tpu.memory_space<smem>>
    %38 = arith.index_cast %37 : i32 to index
    %c0_25 = arith.constant 0 : index
    %39 = vector.load %arg14[%38, %c0_25] : memref<24x128xf32, #tpu.memory_space<vmem>>, vector<1x128xf32>
    %c4_26 = arith.constant 4 : index
    %c0_27 = arith.constant 0 : index
    %40 = vector.load %arg16[%c4_26, %c0_27] : memref<16x128xf32, #tpu.memory_space<vmem>>, vector<1x128xf32>
    tpu.vector_store %arg16[%c4_26, %c0_27], %39 {strides = array<i32>} : memref<16x128xf32, #tpu.memory_space<vmem>>, vector<1x128xf32>,
    %41 = arith.index_cast %37 : i32 to index
    %c0_28 = arith.constant 0 : index
    %42 = vector.load %arg15[%41, %c0_28] : memref<24x128xf32, #tpu.memory_space<vmem>>, vector<1x128xf32>
    %c4_29 = arith.constant 4 : index
    %c0_30 = arith.constant 0 : index
    %43 = vector.load %arg17[%c4_29, %c0_30] : memref<16x128xf32, #tpu.memory_space<vmem>>, vector<1x128xf32>
    tpu.vector_store %arg17[%c4_29, %c0_30], %42 {strides = array<i32>} : memref<16x128xf32, #tpu.memory_space<vmem>>, vector<1x128xf32>,
    %44 = arith.index_cast %arg0 : i32 to index
    %c10 = arith.constant 10 : index
    %45 = memref.load %arg2[%44, %c10] : memref<3x16xi32, #tpu.memory_space<smem>>
    %46 = arith.index_cast %45 : i32 to index
    %c0_31 = arith.constant 0 : index
    %47 = vector.load %arg14[%46, %c0_31] : memref<24x128xf32, #tpu.memory_space<vmem>>, vector<1x128xf32>
    %c5 = arith.constant 5 : index
    %c0_32 = arith.constant 0 : index
    %48 = vector.load %arg16[%c5, %c0_32] : memref<16x128xf32, #tpu.memory_space<vmem>>, vector<1x128xf32>
    tpu.vector_store %arg16[%c5, %c0_32], %47 {strides = array<i32>} : memref<16x128xf32, #tpu.memory_space<vmem>>, vector<1x128xf32>,
    %49 = arith.index_cast %45 : i32 to index
    %c0_33 = arith.constant 0 : index
    %50 = vector.load %arg15[%49, %c0_33] : memref<24x128xf32, #tpu.memory_space<vmem>>, vector<1x128xf32>
    %c5_34 = arith.constant 5 : index
    %c0_35 = arith.constant 0 : index
    %51 = vector.load %arg17[%c5_34, %c0_35] : memref<16x128xf32, #tpu.memory_space<vmem>>, vector<1x128xf32>
    tpu.vector_store %arg17[%c5_34, %c0_35], %50 {strides = array<i32>} : memref<16x128xf32, #tpu.memory_space<vmem>>, vector<1x128xf32>,
    %52 = arith.index_cast %arg0 : i32 to index
    %c12 = arith.constant 12 : index
    %53 = memref.load %arg2[%52, %c12] : memref<3x16xi32, #tpu.memory_space<smem>>
    %54 = arith.index_cast %53 : i32 to index
    %c0_36 = arith.constant 0 : index
    %55 = vector.load %arg14[%54, %c0_36] : memref<24x128xf32, #tpu.memory_space<vmem>>, vector<1x128xf32>
    %c6_37 = arith.constant 6 : index
    %c0_38 = arith.constant 0 : index
    %56 = vector.load %arg16[%c6_37, %c0_38] : memref<16x128xf32, #tpu.memory_space<vmem>>, vector<1x128xf32>
    tpu.vector_store %arg16[%c6_37, %c0_38], %55 {strides = array<i32>} : memref<16x128xf32, #tpu.memory_space<vmem>>, vector<1x128xf32>,
    %57 = arith.index_cast %53 : i32 to index
    %c0_39 = arith.constant 0 : index
    %58 = vector.load %arg15[%57, %c0_39] : memref<24x128xf32, #tpu.memory_space<vmem>>, vector<1x128xf32>
    %c6_40 = arith.constant 6 : index
    %c0_41 = arith.constant 0 : index
    %59 = vector.load %arg17[%c6_40, %c0_41] : memref<16x128xf32, #tpu.memory_space<vmem>>, vector<1x128xf32>
    tpu.vector_store %arg17[%c6_40, %c0_41], %58 {strides = array<i32>} : memref<16x128xf32, #tpu.memory_space<vmem>>, vector<1x128xf32>,
    %60 = arith.index_cast %arg0 : i32 to index
    %c14 = arith.constant 14 : index
    %61 = memref.load %arg2[%60, %c14] : memref<3x16xi32, #tpu.memory_space<smem>>
    %62 = arith.index_cast %61 : i32 to index
    %c0_42 = arith.constant 0 : index
    %63 = vector.load %arg14[%62, %c0_42] : memref<24x128xf32, #tpu.memory_space<vmem>>, vector<1x128xf32>
    %c7 = arith.constant 7 : index
    %c0_43 = arith.constant 0 : index
    %64 = vector.load %arg16[%c7, %c0_43] : memref<16x128xf32, #tpu.memory_space<vmem>>, vector<1x128xf32>
    tpu.vector_store %arg16[%c7, %c0_43], %63 {strides = array<i32>} : memref<16x128xf32, #tpu.memory_space<vmem>>, vector<1x128xf32>,
    %65 = arith.index_cast %61 : i32 to index
    %c0_44 = arith.constant 0 : index
    %66 = vector.load %arg15[%65, %c0_44] : memref<24x128xf32, #tpu.memory_space<vmem>>, vector<1x128xf32>
    %c7_45 = arith.constant 7 : index
    %c0_46 = arith.constant 0 : index
    %67 = vector.load %arg17[%c7_45, %c0_46] : memref<16x128xf32, #tpu.memory_space<vmem>>, vector<1x128xf32>
    tpu.vector_store %arg17[%c7_45, %c0_46], %66 {strides = array<i32>} : memref<16x128xf32, #tpu.memory_space<vmem>>, vector<1x128xf32>,
    %68 = arith.index_cast %arg0 : i32 to index
    %c1_47 = arith.constant 1 : index
    %69 = memref.load %arg2[%68, %c1_47] : memref<3x16xi32, #tpu.memory_space<smem>>
    %70 = arith.index_cast %69 : i32 to index
    %c0_48 = arith.constant 0 : index
    %71 = vector.load %arg14[%70, %c0_48] : memref<24x128xf32, #tpu.memory_space<vmem>>, vector<1x128xf32>
    %c8_49 = arith.constant 8 : index
    %c0_50 = arith.constant 0 : index
    %72 = vector.load %arg16[%c8_49, %c0_50] : memref<16x128xf32, #tpu.memory_space<vmem>>, vector<1x128xf32>
    tpu.vector_store %arg16[%c8_49, %c0_50], %71 {strides = array<i32>} : memref<16x128xf32, #tpu.memory_space<vmem>>, vector<1x128xf32>,
    %73 = arith.index_cast %69 : i32 to index
    %c0_51 = arith.constant 0 : index
    %74 = vector.load %arg15[%73, %c0_51] : memref<24x128xf32, #tpu.memory_space<vmem>>, vector<1x128xf32>
    %c8_52 = arith.constant 8 : index
    %c0_53 = arith.constant 0 : index
    %75 = vector.load %arg17[%c8_52, %c0_53] : memref<16x128xf32, #tpu.memory_space<vmem>>, vector<1x128xf32>
    tpu.vector_store %arg17[%c8_52, %c0_53], %74 {strides = array<i32>} : memref<16x128xf32, #tpu.memory_space<vmem>>, vector<1x128xf32>,
    %76 = arith.index_cast %arg0 : i32 to index
    %c3_54 = arith.constant 3 : index
    %77 = memref.load %arg2[%76, %c3_54] : memref<3x16xi32, #tpu.memory_space<smem>>
    %78 = arith.index_cast %77 : i32 to index
    %c0_55 = arith.constant 0 : index
    %79 = vector.load %arg14[%78, %c0_55] : memref<24x128xf32, #tpu.memory_space<vmem>>, vector<1x128xf32>
    %c9 = arith.constant 9 : index
    %c0_56 = arith.constant 0 : index
    %80 = vector.load %arg16[%c9, %c0_56] : memref<16x128xf32, #tpu.memory_space<vmem>>, vector<1x128xf32>
    tpu.vector_store %arg16[%c9, %c0_56], %79 {strides = array<i32>} : memref<16x128xf32, #tpu.memory_space<vmem>>, vector<1x128xf32>,
    %81 = arith.index_cast %77 : i32 to index
    %c0_57 = arith.constant 0 : index
    %82 = vector.load %arg15[%81, %c0_57] : memref<24x128xf32, #tpu.memory_space<vmem>>, vector<1x128xf32>
    %c9_58 = arith.constant 9 : index
    %c0_59 = arith.constant 0 : index
    %83 = vector.load %arg17[%c9_58, %c0_59] : memref<16x128xf32, #tpu.memory_space<vmem>>, vector<1x128xf32>
    tpu.vector_store %arg17[%c9_58, %c0_59], %82 {strides = array<i32>} : memref<16x128xf32, #tpu.memory_space<vmem>>, vector<1x128xf32>,
    %84 = arith.index_cast %arg0 : i32 to index
    %c5_60 = arith.constant 5 : index
    %85 = memref.load %arg2[%84, %c5_60] : memref<3x16xi32, #tpu.memory_space<smem>>
    %86 = arith.index_cast %85 : i32 to index
    %c0_61 = arith.constant 0 : index
    %87 = vector.load %arg14[%86, %c0_61] : memref<24x128xf32, #tpu.memory_space<vmem>>, vector<1x128xf32>
    %c10_62 = arith.constant 10 : index
    %c0_63 = arith.constant 0 : index
    %88 = vector.load %arg16[%c10_62, %c0_63] : memref<16x128xf32, #tpu.memory_space<vmem>>, vector<1x128xf32>
    tpu.vector_store %arg16[%c10_62, %c0_63], %87 {strides = array<i32>} : memref<16x128xf32, #tpu.memory_space<vmem>>, vector<1x128xf32>,
    %89 = arith.index_cast %85 : i32 to index
    %c0_64 = arith.constant 0 : index
    %90 = vector.load %arg15[%89, %c0_64] : memref<24x128xf32, #tpu.memory_space<vmem>>, vector<1x128xf32>
    %c10_65 = arith.constant 10 : index
    %c0_66 = arith.constant 0 : index
    %91 = vector.load %arg17[%c10_65, %c0_66] : memref<16x128xf32, #tpu.memory_space<vmem>>, vector<1x128xf32>
    tpu.vector_store %arg17[%c10_65, %c0_66], %90 {strides = array<i32>} : memref<16x128xf32, #tpu.memory_space<vmem>>, vector<1x128xf32>,
    %92 = arith.index_cast %arg0 : i32 to index
    %c7_67 = arith.constant 7 : index
    %93 = memref.load %arg2[%92, %c7_67] : memref<3x16xi32, #tpu.memory_space<smem>>
    %94 = arith.index_cast %93 : i32 to index
    %c0_68 = arith.constant 0 : index
    %95 = vector.load %arg14[%94, %c0_68] : memref<24x128xf32, #tpu.memory_space<vmem>>, vector<1x128xf32>
    %c11 = arith.constant 11 : index
    %c0_69 = arith.constant 0 : index
    %96 = vector.load %arg16[%c11, %c0_69] : memref<16x128xf32, #tpu.memory_space<vmem>>, vector<1x128xf32>
    tpu.vector_store %arg16[%c11, %c0_69], %95 {strides = array<i32>} : memref<16x128xf32, #tpu.memory_space<vmem>>, vector<1x128xf32>,
    %97 = arith.index_cast %93 : i32 to index
    %c0_70 = arith.constant 0 : index
    %98 = vector.load %arg15[%97, %c0_70] : memref<24x128xf32, #tpu.memory_space<vmem>>, vector<1x128xf32>
    %c11_71 = arith.constant 11 : index
    %c0_72 = arith.constant 0 : index
    %99 = vector.load %arg17[%c11_71, %c0_72] : memref<16x128xf32, #tpu.memory_space<vmem>>, vector<1x128xf32>
    tpu.vector_store %arg17[%c11_71, %c0_72], %98 {strides = array<i32>} : memref<16x128xf32, #tpu.memory_space<vmem>>, vector<1x128xf32>,
    %100 = arith.index_cast %arg0 : i32 to index
    %c9_73 = arith.constant 9 : index
    %101 = memref.load %arg2[%100, %c9_73] : memref<3x16xi32, #tpu.memory_space<smem>>
    %102 = arith.index_cast %101 : i32 to index
    %c0_74 = arith.constant 0 : index
    %103 = vector.load %arg14[%102, %c0_74] : memref<24x128xf32, #tpu.memory_space<vmem>>, vector<1x128xf32>
    %c12_75 = arith.constant 12 : index
    %c0_76 = arith.constant 0 : index
    %104 = vector.load %arg16[%c12_75, %c0_76] : memref<16x128xf32, #tpu.memory_space<vmem>>, vector<1x128xf32>
    tpu.vector_store %arg16[%c12_75, %c0_76], %103 {strides = array<i32>} : memref<16x128xf32, #tpu.memory_space<vmem>>, vector<1x128xf32>,
    %105 = arith.index_cast %101 : i32 to index
    %c0_77 = arith.constant 0 : index
    %106 = vector.load %arg15[%105, %c0_77] : memref<24x128xf32, #tpu.memory_space<vmem>>, vector<1x128xf32>
    %c12_78 = arith.constant 12 : index
    %c0_79 = arith.constant 0 : index
    %107 = vector.load %arg17[%c12_78, %c0_79] : memref<16x128xf32, #tpu.memory_space<vmem>>, vector<1x128xf32>
    tpu.vector_store %arg17[%c12_78, %c0_79], %106 {strides = array<i32>} : memref<16x128xf32, #tpu.memory_space<vmem>>, vector<1x128xf32>,
    %108 = arith.index_cast %arg0 : i32 to index
    %c11_80 = arith.constant 11 : index
    %109 = memref.load %arg2[%108, %c11_80] : memref<3x16xi32, #tpu.memory_space<smem>>
    %110 = arith.index_cast %109 : i32 to index
    %c0_81 = arith.constant 0 : index
    %111 = vector.load %arg14[%110, %c0_81] : memref<24x128xf32, #tpu.memory_space<vmem>>, vector<1x128xf32>
    %c13 = arith.constant 13 : index
    %c0_82 = arith.constant 0 : index
    %112 = vector.load %arg16[%c13, %c0_82] : memref<16x128xf32, #tpu.memory_space<vmem>>, vector<1x128xf32>
    tpu.vector_store %arg16[%c13, %c0_82], %111 {strides = array<i32>} : memref<16x128xf32, #tpu.memory_space<vmem>>, vector<1x128xf32>,
    %113 = arith.index_cast %109 : i32 to index
    %c0_83 = arith.constant 0 : index
    %114 = vector.load %arg15[%113, %c0_83] : memref<24x128xf32, #tpu.memory_space<vmem>>, vector<1x128xf32>
    %c13_84 = arith.constant 13 : index
    %c0_85 = arith.constant 0 : index
    %115 = vector.load %arg17[%c13_84, %c0_85] : memref<16x128xf32, #tpu.memory_space<vmem>>, vector<1x128xf32>
    tpu.vector_store %arg17[%c13_84, %c0_85], %114 {strides = array<i32>} : memref<16x128xf32, #tpu.memory_space<vmem>>, vector<1x128xf32>,
    %116 = arith.index_cast %arg0 : i32 to index
    %c13_86 = arith.constant 13 : index
    %117 = memref.load %arg2[%116, %c13_86] : memref<3x16xi32, #tpu.memory_space<smem>>
    %118 = arith.index_cast %117 : i32 to index
    %c0_87 = arith.constant 0 : index
    %119 = vector.load %arg14[%118, %c0_87] : memref<24x128xf32, #tpu.memory_space<vmem>>, vector<1x128xf32>
    %c14_88 = arith.constant 14 : index
    %c0_89 = arith.constant 0 : index
    %120 = vector.load %arg16[%c14_88, %c0_89] : memref<16x128xf32, #tpu.memory_space<vmem>>, vector<1x128xf32>
    tpu.vector_store %arg16[%c14_88, %c0_89], %119 {strides = array<i32>} : memref<16x128xf32, #tpu.memory_space<vmem>>, vector<1x128xf32>,
    %121 = arith.index_cast %117 : i32 to index
    %c0_90 = arith.constant 0 : index
    %122 = vector.load %arg15[%121, %c0_90] : memref<24x128xf32, #tpu.memory_space<vmem>>, vector<1x128xf32>
    %c14_91 = arith.constant 14 : index
    %c0_92 = arith.constant 0 : index
    %123 = vector.load %arg17[%c14_91, %c0_92] : memref<16x128xf32, #tpu.memory_space<vmem>>, vector<1x128xf32>
    tpu.vector_store %arg17[%c14_91, %c0_92], %122 {strides = array<i32>} : memref<16x128xf32, #tpu.memory_space<vmem>>, vector<1x128xf32>,
    %124 = arith.index_cast %arg0 : i32 to index
    %c15 = arith.constant 15 : index
    %125 = memref.load %arg2[%124, %c15] : memref<3x16xi32, #tpu.memory_space<smem>>
    %126 = arith.index_cast %125 : i32 to index
    %c0_93 = arith.constant 0 : index
    %127 = vector.load %arg14[%126, %c0_93] : memref<24x128xf32, #tpu.memory_space<vmem>>, vector<1x128xf32>
    %c15_94 = arith.constant 15 : index
    %c0_95 = arith.constant 0 : index
    %128 = vector.load %arg16[%c15_94, %c0_95] : memref<16x128xf32, #tpu.memory_space<vmem>>, vector<1x128xf32>
    tpu.vector_store %arg16[%c15_94, %c0_95], %127 {strides = array<i32>} : memref<16x128xf32, #tpu.memory_space<vmem>>, vector<1x128xf32>,
    %129 = arith.index_cast %125 : i32 to index
    %c0_96 = arith.constant 0 : index
    %130 = vector.load %arg15[%129, %c0_96] : memref<24x128xf32, #tpu.memory_space<vmem>>, vector<1x128xf32>
    %c15_97 = arith.constant 15 : index
    %c0_98 = arith.constant 0 : index
    %131 = vector.load %arg17[%c15_97, %c0_98] : memref<16x128xf32, #tpu.memory_space<vmem>>, vector<1x128xf32>
    tpu.vector_store %arg17[%c15_97, %c0_98], %130 {strides = array<i32>} : memref<16x128xf32, #tpu.memory_space<vmem>>, vector<1x128xf32>,
    %c0_99 = arith.constant 0 : index
    %c0_100 = arith.constant 0 : index
    %132 = vector.load %arg16[%c0_99, %c0_100] : memref<16x128xf32, #tpu.memory_space<vmem>>, vector<16x128xf32>
    %c0_101 = arith.constant 0 : index
    %c0_102 = arith.constant 0 : index
    %133 = vector.load %arg17[%c0_101, %c0_102] : memref<16x128xf32, #tpu.memory_space<vmem>>, vector<16x128xf32>
    %134 = arith.truncf %132 : vector<16x128xf32> to vector<16x128xbf16>
    %c0_103 = arith.constant 0 : index
    %c0_104 = arith.constant 0 : index
    %135 = vector.load %arg9[%c0_103, %c0_104] : memref<128x128xbf16, #tpu.memory_space<vmem>>, vector<128x128xbf16>
    %cst = arith.constant dense<0.000000e+00> : vector<16x128xf32>
    %136 = tpu.matmul %134, %135, %cst {dimension_numbers = #tpu.dot_dimension_numbers<[1], [0], [0], [1], [0, 0, 1, 1], [], []>} : vector<16x128xbf16>, vector<128x128xbf16>, vector<16x128xf32> -> vector<16x128xf32>
    %c0_105 = arith.constant 0 : index
    %c0_106 = arith.constant 0 : index
    %137 = vector.load %arg10[%c0_105, %c0_106] : memref<1x128xf32, #tpu.memory_space<vmem>>, vector<1x128xf32>
    %138 = vector.broadcast %137 : vector<1x128xf32> to vector<16x128xf32>
    %139 = arith.addf %136, %138 : vector<16x128xf32>
    %140 = arith.negf %139 : vector<16x128xf32>
    %141 = math.exp %140 : vector<16x128xf32>
    %cst_107 = arith.constant 1.000000e+00 : f32
    %142 = vector.broadcast %cst_107 : f32 to vector<16x128xf32>
    %143 = arith.addf %142, %141 : vector<16x128xf32>
    %144 = arith.divf %142, %143 : vector<16x128xf32>
    %145 = arith.mulf %144, %133 : vector<16x128xf32>
    %cst_108 = arith.constant 0.000000e+00 : f32
    %146 = vector.broadcast %cst_108 : f32 to vector<8x128xf32>
    %cst_109 = arith.constant 0.000000e+00 : f32
    %147 = vector.broadcast %cst_109 : f32 to vector<8x128xf32>
    %148 = vector.extract_strided_slice %132 {offsets = [0, 0], sizes = [8, 128], strides = [1, 1]} : vector<16x128xf32> to vector<8x128xf32>
    %149 = arith.addf %146, %148 : vector<8x128xf32>
    %150 = vector.extract_strided_slice %145 {offsets = [0, 0], sizes = [8, 128], strides = [1, 1]} : vector<16x128xf32> to vector<8x128xf32>
    %151 = arith.addf %147, %150 : vector<8x128xf32>
    %152 = vector.extract_strided_slice %132 {offsets = [8, 0], sizes = [8, 128], strides = [1, 1]} : vector<16x128xf32> to vector<8x128xf32>
    %153 = arith.addf %149, %152 : vector<8x128xf32>
    %154 = vector.extract_strided_slice %145 {offsets = [8, 0], sizes = [8, 128], strides = [1, 1]} : vector<16x128xf32> to vector<8x128xf32>
    %155 = arith.addf %151, %154 : vector<8x128xf32>
    %156 = arith.truncf %153 : vector<8x128xf32> to vector<8x128xbf16>
    %c0_110 = arith.constant 0 : index
    %c0_111 = arith.constant 0 : index
    %157 = vector.load %arg8[%c0_110, %c0_111] : memref<128x384xbf16, #tpu.memory_space<vmem>>, vector<128x384xbf16>
    %cst_112 = arith.constant dense<0.000000e+00> : vector<8x384xf32>
    %158 = tpu.matmul %156, %157, %cst_112 {dimension_numbers = #tpu.dot_dimension_numbers<[1], [0], [0], [1], [0, 0, 1, 1], [], []>} : vector<8x128xbf16>, vector<128x384xbf16>, vector<8x384xf32> -> vector<8x384xf32>
    %159 = vector.broadcast %0 : vector<1x384xf32> to vector<8x384xf32>
    %160 = arith.addf %158, %159 : vector<8x384xf32>
    %161 = vector.extract_strided_slice %160 {offsets = [0, 0], sizes = [8, 128], strides = [1, 1]} : vector<8x384xf32> to vector<8x128xf32>
    %162 = arith.negf %161 : vector<8x128xf32>
    %163 = math.exp %162 : vector<8x128xf32>
    %cst_113 = arith.constant 1.000000e+00 : f32
    %164 = vector.broadcast %cst_113 : f32 to vector<8x128xf32>
    %165 = arith.addf %164, %163 : vector<8x128xf32>
    %166 = arith.divf %164, %165 : vector<8x128xf32>
    %167 = vector.extract_strided_slice %160 {offsets = [0, 128], sizes = [8, 128], strides = [1, 1]} : vector<8x384xf32> to vector<8x128xf32>
    %168 = arith.negf %167 : vector<8x128xf32>
    %169 = math.exp %168 : vector<8x128xf32>
    %cst_114 = arith.constant 1.000000e+00 : f32
    %170 = vector.broadcast %cst_114 : f32 to vector<8x128xf32>
    %171 = arith.addf %170, %169 : vector<8x128xf32>
    %172 = arith.divf %170, %171 : vector<8x128xf32>
    %173 = vector.extract_strided_slice %160 {offsets = [0, 256], sizes = [8, 128], strides = [1, 1]} : vector<8x384xf32> to vector<8x128xf32>
    %174 = math.tanh %173 : vector<8x128xf32>
    %175 = arith.mulf %166, %174 : vector<8x128xf32>
    %176 = arith.addf %175, %155 : vector<8x128xf32>
    %177 = math.tanh %176 : vector<8x128xf32>
    %178 = arith.mulf %172, %177 : vector<8x128xf32>
    %179 = arith.index_cast %arg0 : i32 to index
    %c0_115 = arith.constant 0 : index
    %180 = memref.load %arg1[%179, %c0_115] : memref<3x8xi32, #tpu.memory_space<smem>>
    %181 = vector.extract_strided_slice %178 {offsets = [0, 0], sizes = [1, 128], strides = [1, 1]} : vector<8x128xf32> to vector<1x128xf32>
    %182 = arith.index_cast %180 : i32 to index
    %c0_116 = arith.constant 0 : index
    %183 = vector.load %arg14[%182, %c0_116] : memref<24x128xf32, #tpu.memory_space<vmem>>, vector<1x128xf32>
    tpu.vector_store %arg14[%182, %c0_116], %181 {strides = array<i32>} : memref<24x128xf32, #tpu.memory_space<vmem>>, vector<1x128xf32>,
    %184 = vector.extract_strided_slice %176 {offsets = [0, 0], sizes = [1, 128], strides = [1, 1]} : vector<8x128xf32> to vector<1x128xf32>
    %185 = arith.index_cast %180 : i32 to index
    %c0_117 = arith.constant 0 : index
    %186 = vector.load %arg15[%185, %c0_117] : memref<24x128xf32, #tpu.memory_space<vmem>>, vector<1x128xf32>
    tpu.vector_store %arg15[%185, %c0_117], %184 {strides = array<i32>} : memref<24x128xf32, #tpu.memory_space<vmem>>, vector<1x128xf32>,
    %187 = arith.index_cast %arg0 : i32 to index
    %c1_118 = arith.constant 1 : index
    %188 = memref.load %arg1[%187, %c1_118] : memref<3x8xi32, #tpu.memory_space<smem>>
    %189 = vector.extract_strided_slice %178 {offsets = [1, 0], sizes = [1, 128], strides = [1, 1]} : vector<8x128xf32> to vector<1x128xf32>
    %190 = arith.index_cast %188 : i32 to index
    %c0_119 = arith.constant 0 : index
    %191 = vector.load %arg14[%190, %c0_119] : memref<24x128xf32, #tpu.memory_space<vmem>>, vector<1x128xf32>
    tpu.vector_store %arg14[%190, %c0_119], %189 {strides = array<i32>} : memref<24x128xf32, #tpu.memory_space<vmem>>, vector<1x128xf32>,
    %192 = vector.extract_strided_slice %176 {offsets = [1, 0], sizes = [1, 128], strides = [1, 1]} : vector<8x128xf32> to vector<1x128xf32>
    %193 = arith.index_cast %188 : i32 to index
    %c0_120 = arith.constant 0 : index
    %194 = vector.load %arg15[%193, %c0_120] : memref<24x128xf32, #tpu.memory_space<vmem>>, vector<1x128xf32>
    tpu.vector_store %arg15[%193, %c0_120], %192 {strides = array<i32>} : memref<24x128xf32, #tpu.memory_space<vmem>>, vector<1x128xf32>,
    %195 = arith.index_cast %arg0 : i32 to index
    %c2_121 = arith.constant 2 : index
    %196 = memref.load %arg1[%195, %c2_121] : memref<3x8xi32, #tpu.memory_space<smem>>
    %197 = vector.extract_strided_slice %178 {offsets = [2, 0], sizes = [1, 128], strides = [1, 1]} : vector<8x128xf32> to vector<1x128xf32>
    %198 = arith.index_cast %196 : i32 to index
    %c0_122 = arith.constant 0 : index
    %199 = vector.load %arg14[%198, %c0_122] : memref<24x128xf32, #tpu.memory_space<vmem>>, vector<1x128xf32>
    tpu.vector_store %arg14[%198, %c0_122], %197 {strides = array<i32>} : memref<24x128xf32, #tpu.memory_space<vmem>>, vector<1x128xf32>,
    %200 = vector.extract_strided_slice %176 {offsets = [2, 0], sizes = [1, 128], strides = [1, 1]} : vector<8x128xf32> to vector<1x128xf32>
    %201 = arith.index_cast %196 : i32 to index
    %c0_123 = arith.constant 0 : index
    %202 = vector.load %arg15[%201, %c0_123] : memref<24x128xf32, #tpu.memory_space<vmem>>, vector<1x128xf32>
    tpu.vector_store %arg15[%201, %c0_123], %200 {strides = array<i32>} : memref<24x128xf32, #tpu.memory_space<vmem>>, vector<1x128xf32>,
    %203 = arith.index_cast %arg0 : i32 to index
    %c3_124 = arith.constant 3 : index
    %204 = memref.load %arg1[%203, %c3_124] : memref<3x8xi32, #tpu.memory_space<smem>>
    %205 = vector.extract_strided_slice %178 {offsets = [3, 0], sizes = [1, 128], strides = [1, 1]} : vector<8x128xf32> to vector<1x128xf32>
    %206 = arith.index_cast %204 : i32 to index
    %c0_125 = arith.constant 0 : index
    %207 = vector.load %arg14[%206, %c0_125] : memref<24x128xf32, #tpu.memory_space<vmem>>, vector<1x128xf32>
    tpu.vector_store %arg14[%206, %c0_125], %205 {strides = array<i32>} : memref<24x128xf32, #tpu.memory_space<vmem>>, vector<1x128xf32>,
    %208 = vector.extract_strided_slice %176 {offsets = [3, 0], sizes = [1, 128], strides = [1, 1]} : vector<8x128xf32> to vector<1x128xf32>
    %209 = arith.index_cast %204 : i32 to index
    %c0_126 = arith.constant 0 : index
    %210 = vector.load %arg15[%209, %c0_126] : memref<24x128xf32, #tpu.memory_space<vmem>>, vector<1x128xf32>
    tpu.vector_store %arg15[%209, %c0_126], %208 {strides = array<i32>} : memref<24x128xf32, #tpu.memory_space<vmem>>, vector<1x128xf32>,
    %211 = arith.index_cast %arg0 : i32 to index
    %c4_127 = arith.constant 4 : index
    %212 = memref.load %arg1[%211, %c4_127] : memref<3x8xi32, #tpu.memory_space<smem>>
    %213 = vector.extract_strided_slice %178 {offsets = [4, 0], sizes = [1, 128], strides = [1, 1]} : vector<8x128xf32> to vector<1x128xf32>
    %214 = arith.index_cast %212 : i32 to index
    %c0_128 = arith.constant 0 : index
    %215 = vector.load %arg14[%214, %c0_128] : memref<24x128xf32, #tpu.memory_space<vmem>>, vector<1x128xf32>
    tpu.vector_store %arg14[%214, %c0_128], %213 {strides = array<i32>} : memref<24x128xf32, #tpu.memory_space<vmem>>, vector<1x128xf32>,
    %216 = vector.extract_strided_slice %176 {offsets = [4, 0], sizes = [1, 128], strides = [1, 1]} : vector<8x128xf32> to vector<1x128xf32>
    %217 = arith.index_cast %212 : i32 to index
    %c0_129 = arith.constant 0 : index
    %218 = vector.load %arg15[%217, %c0_129] : memref<24x128xf32, #tpu.memory_space<vmem>>, vector<1x128xf32>
    tpu.vector_store %arg15[%217, %c0_129], %216 {strides = array<i32>} : memref<24x128xf32, #tpu.memory_space<vmem>>, vector<1x128xf32>,
    %219 = arith.index_cast %arg0 : i32 to index
    %c5_130 = arith.constant 5 : index
    %220 = memref.load %arg1[%219, %c5_130] : memref<3x8xi32, #tpu.memory_space<smem>>
    %221 = vector.extract_strided_slice %178 {offsets = [5, 0], sizes = [1, 128], strides = [1, 1]} : vector<8x128xf32> to vector<1x128xf32>
    %222 = arith.index_cast %220 : i32 to index
    %c0_131 = arith.constant 0 : index
    %223 = vector.load %arg14[%222, %c0_131] : memref<24x128xf32, #tpu.memory_space<vmem>>, vector<1x128xf32>
    tpu.vector_store %arg14[%222, %c0_131], %221 {strides = array<i32>} : memref<24x128xf32, #tpu.memory_space<vmem>>, vector<1x128xf32>,
    %224 = vector.extract_strided_slice %176 {offsets = [5, 0], sizes = [1, 128], strides = [1, 1]} : vector<8x128xf32> to vector<1x128xf32>
    %225 = arith.index_cast %220 : i32 to index
    %c0_132 = arith.constant 0 : index
    %226 = vector.load %arg15[%225, %c0_132] : memref<24x128xf32, #tpu.memory_space<vmem>>, vector<1x128xf32>
    tpu.vector_store %arg15[%225, %c0_132], %224 {strides = array<i32>} : memref<24x128xf32, #tpu.memory_space<vmem>>, vector<1x128xf32>,
    %227 = arith.index_cast %arg0 : i32 to index
    %c6_133 = arith.constant 6 : index
    %228 = memref.load %arg1[%227, %c6_133] : memref<3x8xi32, #tpu.memory_space<smem>>
    %229 = vector.extract_strided_slice %178 {offsets = [6, 0], sizes = [1, 128], strides = [1, 1]} : vector<8x128xf32> to vector<1x128xf32>
    %230 = arith.index_cast %228 : i32 to index
    %c0_134 = arith.constant 0 : index
    %231 = vector.load %arg14[%230, %c0_134] : memref<24x128xf32, #tpu.memory_space<vmem>>, vector<1x128xf32>
    tpu.vector_store %arg14[%230, %c0_134], %229 {strides = array<i32>} : memref<24x128xf32, #tpu.memory_space<vmem>>, vector<1x128xf32>,
    %232 = vector.extract_strided_slice %176 {offsets = [6, 0], sizes = [1, 128], strides = [1, 1]} : vector<8x128xf32> to vector<1x128xf32>
    %233 = arith.index_cast %228 : i32 to index
    %c0_135 = arith.constant 0 : index
    %234 = vector.load %arg15[%233, %c0_135] : memref<24x128xf32, #tpu.memory_space<vmem>>, vector<1x128xf32>
    tpu.vector_store %arg15[%233, %c0_135], %232 {strides = array<i32>} : memref<24x128xf32, #tpu.memory_space<vmem>>, vector<1x128xf32>,
    %235 = arith.index_cast %arg0 : i32 to index
    %c7_136 = arith.constant 7 : index
    %236 = memref.load %arg1[%235, %c7_136] : memref<3x8xi32, #tpu.memory_space<smem>>
    %237 = vector.extract_strided_slice %178 {offsets = [7, 0], sizes = [1, 128], strides = [1, 1]} : vector<8x128xf32> to vector<1x128xf32>
    %238 = arith.index_cast %236 : i32 to index
    %c0_137 = arith.constant 0 : index
    %239 = vector.load %arg14[%238, %c0_137] : memref<24x128xf32, #tpu.memory_space<vmem>>, vector<1x128xf32>
    tpu.vector_store %arg14[%238, %c0_137], %237 {strides = array<i32>} : memref<24x128xf32, #tpu.memory_space<vmem>>, vector<1x128xf32>,
    %240 = vector.extract_strided_slice %176 {offsets = [7, 0], sizes = [1, 128], strides = [1, 1]} : vector<8x128xf32> to vector<1x128xf32>
    %241 = arith.index_cast %236 : i32 to index
    %c0_138 = arith.constant 0 : index
    %242 = vector.load %arg15[%241, %c0_138] : memref<24x128xf32, #tpu.memory_space<vmem>>, vector<1x128xf32>
    tpu.vector_store %arg15[%241, %c0_138], %240 {strides = array<i32>} : memref<24x128xf32, #tpu.memory_space<vmem>>, vector<1x128xf32>,
    %c2_i32 = arith.constant 2 : i32
    %243 = arith.cmpi eq, %arg0, %c2_i32 : i32
    %244 = arith.extui %243 : i1 to i32
    %c0_i32_139 = arith.constant 0 : i32
    %245 = arith.cmpi ne, %244, %c0_i32_139 : i32
    scf.if %245 {
      %c0_140 = arith.constant 0 : index
      %c0_141 = arith.constant 0 : index
      %246 = vector.load %arg14[%c0_140, %c0_141] : memref<24x128xf32, #tpu.memory_space<vmem>>, vector<24x128xf32>
      %c0_142 = arith.constant 0 : index
      %c0_143 = arith.constant 0 : index
      %247 = vector.load %arg5[%c0_142, %c0_143] : memref<24x1xf32, #tpu.memory_space<vmem>>, vector<24x1xf32>
      %248 = vector.broadcast %247 : vector<24x1xf32> to vector<24x128xf32>
      %249 = arith.mulf %246, %248 : vector<24x128xf32>
      %cst_144 = arith.constant dense<0.000000e+00> : vector<128xf32>
      %250 = vector.multi_reduction <add>, %249, %cst_144 [0] : vector<24x128xf32> to vector<128xf32>
      %251 = vector.shape_cast %250 : vector<128xf32> to vector<1x128xf32>
      %252 = arith.truncf %251 : vector<1x128xf32> to vector<1x128xbf16>
      %c0_145 = arith.constant 0 : index
      %c0_146 = arith.constant 0 : index
      %253 = vector.load %arg11[%c0_145, %c0_146] : memref<128x128xbf16, #tpu.memory_space<vmem>>, vector<128x128xbf16>
      %cst_147 = arith.constant dense<0.000000e+00> : vector<1x128xf32>
      %254 = tpu.matmul %252, %253, %cst_147 {dimension_numbers = #tpu.dot_dimension_numbers<[1], [0], [0], [1], [0, 0, 1, 1], [], []>} : vector<1x128xbf16>, vector<128x128xbf16>, vector<1x128xf32> -> vector<1x128xf32>
      %c0_148 = arith.constant 0 : index
      %c0_149 = arith.constant 0 : index
      %255 = vector.load %arg12[%c0_148, %c0_149] : memref<1x128xf32, #tpu.memory_space<vmem>>, vector<1x128xf32>
      %256 = arith.addf %254, %255 : vector<1x128xf32>
      %cst_150 = arith.constant dense<0xFF800000> : vector<1xf32>
      %257 = vector.multi_reduction <maximumf>, %256, %cst_150 [1] : vector<1x128xf32> to vector<1xf32>
      %258 = vector.shape_cast %257 : vector<1xf32> to vector<1x1xf32>
      %259 = vector.broadcast %258 : vector<1x1xf32> to vector<1x128xf32>
      %260 = arith.subf %256, %259 : vector<1x128xf32>
      %261 = math.exp %260 : vector<1x128xf32>
      %cst_151 = arith.constant dense<0.000000e+00> : vector<1xf32>
      %262 = vector.multi_reduction <add>, %261, %cst_151 [1] : vector<1x128xf32> to vector<1xf32>
      %263 = vector.shape_cast %262 : vector<1xf32> to vector<1x1xf32>
      %264 = math.log %263 : vector<1x1xf32>
      %265 = vector.broadcast %264 : vector<1x1xf32> to vector<1x128xf32>
      %266 = arith.subf %260, %265 : vector<1x128xf32>
      %c0_152 = arith.constant 0 : index
      %c0_153 = arith.constant 0 : index
      %267 = vector.load %arg13[%c0_152, %c0_153] : memref<1x128xf32, #tpu.memory_space<vmem>>, vector<1x128xf32>
      tpu.vector_store %arg13[%c0_152, %c0_153], %266 {strides = array<i32>} : memref<1x128xf32, #tpu.memory_space<vmem>>, vector<1x128xf32>,
    } else {
    }
    return
  }
  func.func @transform_0(%arg0: i32, %arg1: memref<3x8xi32, #tpu.memory_space<smem>>, %arg2: memref<3x16xi32, #tpu.memory_space<smem>>) -> (i32, i32) {
    %c0_i32 = arith.constant 0 : i32
    %c0_i32_0 = arith.constant 0 : i32
    %c0_i32_1 = arith.constant 0 : i32
    return %c0_i32, %c0_i32_0 : i32, i32
  }
  func.func @transform_1(%arg0: i32, %arg1: memref<3x8xi32, #tpu.memory_space<smem>>, %arg2: memref<3x16xi32, #tpu.memory_space<smem>>) -> (i32, i32) {
    %c0_i32 = arith.constant 0 : i32
    %c0_i32_0 = arith.constant 0 : i32
    %c0_i32_1 = arith.constant 0 : i32
    return %c0_i32, %c0_i32_0 : i32, i32
  }
  func.func @transform_2(%arg0: i32, %arg1: memref<3x8xi32, #tpu.memory_space<smem>>, %arg2: memref<3x16xi32, #tpu.memory_space<smem>>) -> (i32, i32) {
    %c0_i32 = arith.constant 0 : i32
    %c0_i32_0 = arith.constant 0 : i32
    %c0_i32_1 = arith.constant 0 : i32
    return %c0_i32, %c0_i32_0 : i32, i32
  }
  func.func @transform_3(%arg0: i32, %arg1: memref<3x8xi32, #tpu.memory_space<smem>>, %arg2: memref<3x16xi32, #tpu.memory_space<smem>>) -> (i32, i32) {
    %c0_i32 = arith.constant 0 : i32
    %c0_i32_0 = arith.constant 0 : i32
    %c0_i32_1 = arith.constant 0 : i32
    return %c0_i32, %c0_i32_0 : i32, i32
  }
  func.func @transform_4(%arg0: i32, %arg1: memref<3x8xi32, #tpu.memory_space<smem>>, %arg2: memref<3x16xi32, #tpu.memory_space<smem>>) -> (i32, i32) {
    %c0_i32 = arith.constant 0 : i32
    %c0_i32_0 = arith.constant 0 : i32
    %c0_i32_1 = arith.constant 0 : i32
    return %c0_i32, %c0_i32_0 : i32, i32
  }
  func.func @transform_5(%arg0: i32, %arg1: memref<3x8xi32, #tpu.memory_space<smem>>, %arg2: memref<3x16xi32, #tpu.memory_space<smem>>) -> (i32, i32) {
    %c0_i32 = arith.constant 0 : i32
    %c0_i32_0 = arith.constant 0 : i32
    %c0_i32_1 = arith.constant 0 : i32
    return %c0_i32, %c0_i32_0 : i32, i32
  }
  func.func @transform_6(%arg0: i32, %arg1: memref<3x8xi32, #tpu.memory_space<smem>>, %arg2: memref<3x16xi32, #tpu.memory_space<smem>>) -> (i32, i32) {
    %c0_i32 = arith.constant 0 : i32
    %c0_i32_0 = arith.constant 0 : i32
    %c0_i32_1 = arith.constant 0 : i32
    return %c0_i32, %c0_i32_0 : i32, i32
  }
  func.func @transform_7(%arg0: i32, %arg1: memref<3x8xi32, #tpu.memory_space<smem>>, %arg2: memref<3x16xi32, #tpu.memory_space<smem>>) -> (i32, i32) {
    %c0_i32 = arith.constant 0 : i32
    %c0_i32_0 = arith.constant 0 : i32
    %c0_i32_1 = arith.constant 0 : i32
    return %c0_i32, %c0_i32_0 : i32, i32
  }
  func.func @transform_8(%arg0: i32, %arg1: memref<3x8xi32, #tpu.memory_space<smem>>, %arg2: memref<3x16xi32, #tpu.memory_space<smem>>) -> (i32, i32) {
    %c0_i32 = arith.constant 0 : i32
    %c0_i32_0 = arith.constant 0 : i32
    %c0_i32_1 = arith.constant 0 : i32
    return %c0_i32, %c0_i32_0 : i32, i32
  }
  func.func @transform_9(%arg0: i32, %arg1: memref<3x8xi32, #tpu.memory_space<smem>>, %arg2: memref<3x16xi32, #tpu.memory_space<smem>>) -> (i32, i32) {
    %c0_i32 = arith.constant 0 : i32
    %c0_i32_0 = arith.constant 0 : i32
    %c0_i32_1 = arith.constant 0 : i32
    return %c0_i32, %c0_i32_0 : i32, i32
  }
  func.func @transform_10(%arg0: i32, %arg1: memref<3x8xi32, #tpu.memory_space<smem>>, %arg2: memref<3x16xi32, #tpu.memory_space<smem>>) -> (i32, i32) {
    %c0_i32 = arith.constant 0 : i32
    %c0_i32_0 = arith.constant 0 : i32
    %c0_i32_1 = arith.constant 0 : i32
    return %c0_i32, %c0_i32_0 : i32, i32
  }
}

</mosaic_0001>

<llo_original>
// kernel: tpu_custom_call.1
$region0: #{tpu_custom_call.1}
  #allocation0 [shape = 'u32[]', space=smem, size = 0x4, offset = 0x4, fixed_abs, tag = 'smem constant byte address 0x4 - core index']
  #allocation1 [shape = 'u32[144,128]{1,0:T(1,128)}', space=vmem, size = 0x12000, scoped, tag = 'internal scratch']
  #allocation2 [shape = 'f32[24,128]{1,0:T(8,128)}', space=vmem, size = 0x3000, scoped, tag = 'scratch operand']
  #allocation3 [shape = 'f32[24,128]{1,0:T(8,128)}', space=vmem, size = 0x3000, scoped, tag = 'scratch operand']
  #allocation4 [shape = 'f32[16,128]{1,0:T(8,128)}', space=vmem, size = 0x2000, scoped, tag = 'scratch operand']
  #allocation5 [shape = 'f32[16,128]{1,0:T(8,128)}', space=vmem, size = 0x2000, scoped, tag = 'scratch operand']
  #allocation6 [shape = 's32[1]{0}', space=sflag, size = 0x4, scoped, tag = 'scoped memory for tpu_custom_call.1']
  #allocation7 [shape = 'u8[2048]{0}', space=smem, size = 0x800, scoped, tag = 'prefetched SMEM operand 0']
  #allocation8 [shape = 'u8[2048]{0}', space=smem, size = 0x800, scoped, tag = 'prefetched SMEM operand 1']
  %s0 = inlined_call_operand.hbm [shape: s32[3,8], index: 0, kind: input, shape index: {}]
  %s1 = inlined_call_operand.hbm [shape: s32[3,16], index: 1, kind: input, shape index: {}]
  %s2 = inlined_call_operand.vmem [shape: bf16[24,128], index: 2, kind: input, shape index: {}]
  %s3 = inlined_call_operand.vmem [shape: f32[24,128], index: 3, kind: input, shape index: {}]
  %s4 = inlined_call_operand.vmem [shape: f32[24,1], index: 4, kind: input, shape index: {}]
  %s5 = inlined_call_operand.hbm [shape: bf16[128,384], index: 5, kind: input, shape index: {}]
  %s6 = inlined_call_operand.vmem [shape: f32[1,384], index: 6, kind: input, shape index: {}]
  %s7 = inlined_call_operand.hbm [shape: bf16[128,384], index: 7, kind: input, shape index: {}]
  %s8 = inlined_call_operand.hbm [shape: bf16[128,128], index: 8, kind: input, shape index: {}]
  %s9 = inlined_call_operand.vmem [shape: f32[1,128], index: 9, kind: input, shape index: {}]
  %s10 = inlined_call_operand.hbm [shape: bf16[128,128], index: 10, kind: input, shape index: {}]
  %s11 = inlined_call_operand.vmem [shape: f32[1,128], index: 11, kind: input, shape index: {}]
  %s12 = inlined_call_operand.hbm [shape: f32[1,128], index: 12, kind: output, shape index: {}]
  %s13 = sld [smem:[#allocation0]]
  $region97: #{tpu_custom_call.1} parent=0
    _
  %s15 = ssub.s32 1, %s13
  %s16 = scalar_select 0, %s15, %s13
  %18 = dma.hbm_to_smem %s0, 64, [#allocation7], [#allocation6]
  %20 = dma.hbm_to_smem %s1, 64, [#allocation8], [#allocation6]
  %21 = dma.done [#allocation6], 128
  %22 = sfence
  $region1: #{tpu_custom_call.1} parent=0
    #allocation9 [shape = 'u8[98304]{0}', space=vmem, size = 0x18000, scoped, tag = 'input window, operand 5, single buffered']
    #allocation10 [shape = 's32[2]{0}', space=sflag, size = 0x8, scoped, tag = 'scoped memory for tpu_custom_call.1']
    #allocation11 [shape = 's32[2]{0}', space=sflag, size = 0x8, scoped, tag = 'scoped memory for tpu_custom_call.1']
    #allocation12 [shape = 'u8[98304]{0}', space=vmem, size = 0x18000, scoped, tag = 'input window, operand 7, single buffered']
    #allocation13 [shape = 's32[1]{0}', space=sflag, size = 0x4, scoped, tag = 'scoped memory for tpu_custom_call.1']
    #allocation14 [shape = 'u8[32768]{0}', space=vmem, size = 0x8000, scoped, tag = 'input window, operand 8, single buffered']
    #allocation15 [shape = 'u8[32768]{0}', space=vmem, size = 0x8000, scoped, tag = 'input window, operand 10, single buffered']
    #allocation16 [shape = 's32[1]{0}', space=sflag, size = 0x4, scoped, tag = 'scoped memory for tpu_custom_call.1']
    #allocation17 [shape = 'u8[512]{0}', space=vmem, size = 0x400, scoped, tag = 'output window, operand 0, single buffered']
    %23 = vsyncpa [#allocation10], 0
    %24 = vsyncpa [#allocation13], 0
    %25 = vsyncpa [#allocation16], 0
    %26 = vsyncpa [#allocation11], 0
    loop: start=0, step=1, limit=5
    $region2: #{tpu_custom_call.1} parent=1 // loop_pre_header
      _
    $region3: #{tpu_custom_call.1} parent=1 // loop_header
      %s28 = sphi 0, %s32
      %p29 = scmp.ge.s32.totalorder %s28, 5
      %s36 = sphi 0, %s36
      %s38 = sphi 0, %s36
      %s39 = sphi 0, %s38
      %s53 = sphi 0, %s39
      %s57 = sphi 0, %s57
      %s59 = sphi 0, %s57
      %s60 = sphi 0, %s59
      %s74 = sphi 0, %s60
      %s78 = sphi 0, %s78
      %s80 = sphi 0, %s78
      %s81 = sphi 0, %s80
      %s95 = sphi 0, %s81
      %s99 = sphi 0, %s99
      %s101 = sphi 0, %s99
      %s102 = sphi 0, %s101
      %s116 = sphi 0, %s102
      %s120 = sphi 0, %s120
      %s122 = sphi 0, %s120
      %s123 = sphi 0, %s122
      %s137 = sphi 0, %s123
      %s141 = sphi 0, %s141
      %s143 = sphi 0, %s141
      %s144 = sphi 0, %s143
      %s158 = sphi 0, %s144
      %s162 = sphi 0, %s162
      %s164 = sphi 0, %s162
      %s165 = sphi 0, %s164
      %s179 = sphi 0, %s165
      %s183 = sphi 0, %s183
      %s185 = sphi 0, %s183
      %s186 = sphi 0, %s185
      %s200 = sphi 0, %s186
      %s204 = sphi 0, %s204
      %s206 = sphi 0, %s204
      %s207 = sphi 0, %s206
      %s221 = sphi 0, %s207
      %s225 = sphi 0, %s225
      %s227 = sphi 0, %s225
      %s228 = sphi 0, %s227
      %s242 = sphi 0, %s228
      %s246 = sphi 0, %s246
      %s248 = sphi 0, %s246
      %s249 = sphi 0, %s248
      %s263 = sphi 0, %s249
    $region4: #{tpu_custom_call.1} parent=1 // loop_header_branch
      %31 = sbr.rel (%p29) target = $region8
    $region5: #{tpu_custom_call.1} parent=1 // loop_body
      %s33 = ssub.s32 %s28, 1
      %s34 = ssub.s32 %s28, 2
      %s35 = sadd.s32 %s28, 1
      %s37 = sadd.s32 %s36, 1
      %p40 = scmp.eq.s32.totalorder %s28, 2
      %p41 = scmp.ne.s32.totalorder %s36, %s38
      %p42 = scmp.eq.s32.totalorder %s28, 0
      %p43 = por %p41, %p42
      %p44 = scmp.ne.s32.totalorder %s36, %s38
      %p45 = scmp.eq.s32.totalorder %s33, 2
      %p46 = por %p44, %p45
      %p47 = scmp.ne.s32.totalorder %s38, %s39
      %p48 = scmp.eq.s32.totalorder %s33, 0
      %p49 = por %p47, %p48
      %p50 = scmp.ne.s32.totalorder %s38, %s39
      %p51 = scmp.eq.s32.totalorder %s34, 2
      %p52 = por %p50, %p51
      %p54 = scmp.ne.s32.totalorder %s39, %s53
      %p55 = scmp.eq.s32.totalorder %s34, 0
      %p56 = por %p54, %p55
      %s58 = sadd.s32 %s57, 1
      %p61 = scmp.eq.s32.totalorder %s28, 2
      %p62 = scmp.ne.s32.totalorder %s57, %s59
      %p63 = scmp.eq.s32.totalorder %s28, 0
      %p64 = por %p62, %p63
      %p65 = scmp.ne.s32.totalorder %s57, %s59
      %p66 = scmp.eq.s32.totalorder %s33, 2
      %p67 = por %p65, %p66
      %p68 = scmp.ne.s32.totalorder %s59, %s60
      %p69 = scmp.eq.s32.totalorder %s33, 0
      %p70 = por %p68, %p69
      %p71 = scmp.ne.s32.totalorder %s59, %s60
      %p72 = scmp.eq.s32.totalorder %s34, 2
      %p73 = por %p71, %p72
      %p75 = scmp.ne.s32.totalorder %s60, %s74
      %p76 = scmp.eq.s32.totalorder %s34, 0
      %p77 = por %p75, %p76
      %s79 = sadd.s32 %s78, 1
      %p82 = scmp.eq.s32.totalorder %s28, 2
      %p83 = scmp.ne.s32.totalorder %s78, %s80
      %p84 = scmp.eq.s32.totalorder %s28, 0
      %p85 = por %p83, %p84
      %p86 = scmp.ne.s32.totalorder %s78, %s80
      %p87 = scmp.eq.s32.totalorder %s33, 2
      %p88 = por %p86, %p87
      %p89 = scmp.ne.s32.totalorder %s80, %s81
      %p90 = scmp.eq.s32.totalorder %s33, 0
      %p91 = por %p89, %p90
      %p92 = scmp.ne.s32.totalorder %s80, %s81
      %p93 = scmp.eq.s32.totalorder %s34, 2
      %p94 = por %p92, %p93
      %p96 = scmp.ne.s32.totalorder %s81, %s95
      %p97 = scmp.eq.s32.totalorder %s34, 0
      %p98 = por %p96, %p97
      %s100 = sadd.s32 %s99, 1
      %p103 = scmp.eq.s32.totalorder %s28, 2
      %p104 = scmp.ne.s32.totalorder %s99, %s101
      %p105 = scmp.eq.s32.totalorder %s28, 0
      %p106 = por %p104, %p105
      %p107 = scmp.ne.s32.totalorder %s99, %s101
      %p108 = scmp.eq.s32.totalorder %s33, 2
      %p109 = por %p107, %p108
      %p110 = scmp.ne.s32.totalorder %s101, %s102
      %p111 = scmp.eq.s32.totalorder %s33, 0
      %p112 = por %p110, %p111
      %p113 = scmp.ne.s32.totalorder %s101, %s102
      %p114 = scmp.eq.s32.totalorder %s34, 2
      %p115 = por %p113, %p114
      %p117 = scmp.ne.s32.totalorder %s102, %s116
      %p118 = scmp.eq.s32.totalorder %s34, 0
      %p119 = por %p117, %p118
      %s121 = sadd.s32 %s120, 1
      %p124 = scmp.eq.s32.totalorder %s28, 2
      %p125 = scmp.ne.s32.totalorder %s120, %s122
      %p126 = scmp.eq.s32.totalorder %s28, 0
      %p127 = por %p125, %p126
      %p128 = scmp.ne.s32.totalorder %s120, %s122
      %p129 = scmp.eq.s32.totalorder %s33, 2
      %p130 = por %p128, %p129
      %p131 = scmp.ne.s32.totalorder %s122, %s123
      %p132 = scmp.eq.s32.totalorder %s33, 0
      %p133 = por %p131, %p132
      %p134 = scmp.ne.s32.totalorder %s122, %s123
      %p135 = scmp.eq.s32.totalorder %s34, 2
      %p136 = por %p134, %p135
      %p138 = scmp.ne.s32.totalorder %s123, %s137
      %p139 = scmp.eq.s32.totalorder %s34, 0
      %p140 = por %p138, %p139
      %s142 = sadd.s32 %s141, 1
      %p145 = scmp.eq.s32.totalorder %s28, 2
      %p146 = scmp.ne.s32.totalorder %s141, %s143
      %p147 = scmp.eq.s32.totalorder %s28, 0
      %p148 = por %p146, %p147
      %p149 = scmp.ne.s32.totalorder %s141, %s143
      %p150 = scmp.eq.s32.totalorder %s33, 2
      %p151 = por %p149, %p150
      %p152 = scmp.ne.s32.totalorder %s143, %s144
      %p153 = scmp.eq.s32.totalorder %s33, 0
      %p154 = por %p152, %p153
      %p155 = scmp.ne.s32.totalorder %s143, %s144
      %p156 = scmp.eq.s32.totalorder %s34, 2
      %p157 = por %p155, %p156
      %p159 = scmp.ne.s32.totalorder %s144, %s158
      %p160 = scmp.eq.s32.totalorder %s34, 0
      %p161 = por %p159, %p160
      %s163 = sadd.s32 %s162, 1
      %p166 = scmp.eq.s32.totalorder %s28, 2
      %p167 = scmp.ne.s32.totalorder %s162, %s164
      %p168 = scmp.eq.s32.totalorder %s28, 0
      %p169 = por %p167, %p168
      %p170 = scmp.ne.s32.totalorder %s162, %s164
      %p171 = scmp.eq.s32.totalorder %s33, 2
      %p172 = por %p170, %p171
      %p173 = scmp.ne.s32.totalorder %s164, %s165
      %p174 = scmp.eq.s32.totalorder %s33, 0
      %p175 = por %p173, %p174
      %p176 = scmp.ne.s32.totalorder %s164, %s165
      %p177 = scmp.eq.s32.totalorder %s34, 2
      %p178 = por %p176, %p177
      %p180 = scmp.ne.s32.totalorder %s165, %s179
      %p181 = scmp.eq.s32.totalorder %s34, 0
      %p182 = por %p180, %p181
      %s184 = sadd.s32 %s183, 1
      %p187 = scmp.eq.s32.totalorder %s28, 2
      %p188 = scmp.ne.s32.totalorder %s183, %s185
      %p189 = scmp.eq.s32.totalorder %s28, 0
      %p190 = por %p188, %p189
      %p191 = scmp.ne.s32.totalorder %s183, %s185
      %p192 = scmp.eq.s32.totalorder %s33, 2
      %p193 = por %p191, %p192
      %p194 = scmp.ne.s32.totalorder %s185, %s186
      %p195 = scmp.eq.s32.totalorder %s33, 0
      %p196 = por %p194, %p195
      %p197 = scmp.ne.s32.totalorder %s185, %s186
      %p198 = scmp.eq.s32.totalorder %s34, 2
      %p199 = por %p197, %p198
      %p201 = scmp.ne.s32.totalorder %s186, %s200
      %p202 = scmp.eq.s32.totalorder %s34, 0
      %p203 = por %p201, %p202
      %s205 = sadd.s32 %s204, 1
      %p208 = scmp.eq.s32.totalorder %s28, 2
      %p209 = scmp.ne.s32.totalorder %s204, %s206
      %p210 = scmp.eq.s32.totalorder %s28, 0
      %p211 = por %p209, %p210
      %p212 = scmp.ne.s32.totalorder %s204, %s206
      %p213 = scmp.eq.s32.totalorder %s33, 2
      %p214 = por %p212, %p213
      %p215 = scmp.ne.s32.totalorder %s206, %s207
      %p216 = scmp.eq.s32.totalorder %s33, 0
      %p217 = por %p215, %p216
      %p218 = scmp.ne.s32.totalorder %s206, %s207
      %p219 = scmp.eq.s32.totalorder %s34, 2
      %p220 = por %p218, %p219
      %p222 = scmp.ne.s32.totalorder %s207, %s221
      %p223 = scmp.eq.s32.totalorder %s34, 0
      %p224 = por %p222, %p223
      %s226 = sadd.s32 %s225, 1
      %p229 = scmp.eq.s32.totalorder %s28, 2
      %p230 = scmp.ne.s32.totalorder %s225, %s227
      %p231 = scmp.eq.s32.totalorder %s28, 0
      %p232 = por %p230, %p231
      %p233 = scmp.ne.s32.totalorder %s225, %s227
      %p234 = scmp.eq.s32.totalorder %s33, 2
      %p235 = por %p233, %p234
      %p236 = scmp.ne.s32.totalorder %s227, %s228
      %p237 = scmp.eq.s32.totalorder %s33, 0
      %p238 = por %p236, %p237
      %p239 = scmp.ne.s32.totalorder %s227, %s228
      %p240 = scmp.eq.s32.totalorder %s34, 2
      %p241 = por %p239, %p240
      %p243 = scmp.ne.s32.totalorder %s228, %s242
      %p244 = scmp.eq.s32.totalorder %s34, 0
      %p245 = por %p243, %p244
      %s247 = sadd.s32 %s246, 1
      %p250 = scmp.eq.s32.totalorder %s28, 2
      %p251 = scmp.ne.s32.totalorder %s246, %s248
      %p252 = scmp.eq.s32.totalorder %s28, 0
      %p253 = por %p251, %p252
      %p254 = scmp.ne.s32.totalorder %s246, %s248
      %p255 = scmp.eq.s32.totalorder %s33, 2
      %p256 = por %p254, %p255
      %p257 = scmp.ne.s32.totalorder %s248, %s249
      %p258 = scmp.eq.s32.totalorder %s33, 0
      %p259 = por %p257, %p258
      %p260 = scmp.ne.s32.totalorder %s248, %s249
      %p261 = scmp.eq.s32.totalorder %s34, 2
      %p262 = por %p260, %p261
      %p264 = scmp.ne.s32.totalorder %s249, %s263
      %p265 = scmp.eq.s32.totalorder %s34, 0
      %p266 = por %p264, %p265
      %p267 = scmp.le.s32.totalorder 1, %s28
      %p268 = scmp.lt.s32.totalorder %s28, 4
      %p269 = pnand %p267, %p268
      %p270 = pneg %p269
      // Predicated region
      $region9: #{tpu_custom_call.1} parent=5 // pred_check
        _
      $region10: #{tpu_custom_call.1} parent=5 // pred_check_branch
        %272 = sbr.rel (%p269) target = $region12
      $region11: #{tpu_custom_call.1} parent=5 // pred_region
        %s273 = ssub.s32 %s28, 1
        // Predicated region
        $region13: #{tpu_custom_call.1} parent=11 // pred_check
          %p274 = pneg %p49
        $region14: #{tpu_custom_call.1} parent=11 // pred_check_branch
          %276 = sbr.rel (%p274) target = $region16
        $region15: #{tpu_custom_call.1} parent=11 // pred_region
          _
        $region16: #{tpu_custom_call.1} parent=11 // pred_fallthru
          _
        // Predicated region
        $region17: #{tpu_custom_call.1} parent=11 // pred_check
          %p277 = pneg %p70
        $region18: #{tpu_custom_call.1} parent=11 // pred_check_branch
          %279 = sbr.rel (%p277) target = $region20
        $region19: #{tpu_custom_call.1} parent=11 // pred_region
          _
        $region20: #{tpu_custom_call.1} parent=11 // pred_fallthru
          _
        // Predicated region
        $region21: #{tpu_custom_call.1} parent=11 // pred_check
          %p280 = pneg %p91
        $region22: #{tpu_custom_call.1} parent=11 // pred_check_branch
          %282 = sbr.rel (%p280) target = $region24
        $region23: #{tpu_custom_call.1} parent=11 // pred_region
          _
        $region24: #{tpu_custom_call.1} parent=11 // pred_fallthru
          _
        // Predicated region
        $region25: #{tpu_custom_call.1} parent=11 // pred_check
          %p283 = pneg %p112
        $region26: #{tpu_custom_call.1} parent=11 // pred_check_branch
          %285 = sbr.rel (%p283) target = $region28
        $region27: #{tpu_custom_call.1} parent=11 // pred_region
          %s287 = ssub.s32 3072, 3072
          %288 = vsyncadd [#allocation10], %s287
          %s289 = sshll.u32 [#allocation9], 4
          %s290 = int_to_ptr.vmem [resolvable:$true] %s289
          %295 = dma.hbm_to_vmem [thread:$0]  %s5, 3072, %s290, [#allocation10], 192, 192, 12
        $region28: #{tpu_custom_call.1} parent=11 // pred_fallthru
          _
        // Predicated region
        $region29: #{tpu_custom_call.1} parent=11 // pred_check
          %p296 = pneg %p133
        $region30: #{tpu_custom_call.1} parent=11 // pred_check_branch
          %298 = sbr.rel (%p296) target = $region32
        $region31: #{tpu_custom_call.1} parent=11 // pred_region
          _
        $region32: #{tpu_custom_call.1} parent=11 // pred_fallthru
          _
        // Predicated region
        $region33: #{tpu_custom_call.1} parent=11 // pred_check
          %p299 = pneg %p154
        $region34: #{tpu_custom_call.1} parent=11 // pred_check_branch
          %301 = sbr.rel (%p299) target = $region36
        $region35: #{tpu_custom_call.1} parent=11 // pred_region
          %s303 = ssub.s32 3072, 3072
          %304 = vsyncadd [#allocation13], %s303
          %s305 = sshll.u32 [#allocation12], 4
          %s306 = int_to_ptr.vmem [resolvable:$true] %s305
          %311 = dma.hbm_to_vmem [thread:$0]  %s7, 3072, %s306, [#allocation13], 192, 192, 12
        $region36: #{tpu_custom_call.1} parent=11 // pred_fallthru
          _
        // Predicated region
        $region37: #{tpu_custom_call.1} parent=11 // pred_check
          %p312 = pneg %p175
        $region38: #{tpu_custom_call.1} parent=11 // pred_check_branch
          %314 = sbr.rel (%p312) target = $region40
        $region39: #{tpu_custom_call.1} parent=11 // pred_region
          %s316 = ssub.s32 1024, 1024
          %317 = vsyncadd [#allocation13], %s316
          %s318 = sshll.u32 [#allocation14], 4
          %s319 = int_to_ptr.vmem [resolvable:$true] %s318
          %324 = dma.hbm_to_vmem [thread:$0]  %s8, 1024, %s319, [#allocation13], 64, 64, 4
        $region40: #{tpu_custom_call.1} parent=11 // pred_fallthru
          _
        // Predicated region
        $region41: #{tpu_custom_call.1} parent=11 // pred_check
          %p325 = pneg %p196
        $region42: #{tpu_custom_call.1} parent=11 // pred_check_branch
          %327 = sbr.rel (%p325) target = $region44
        $region43: #{tpu_custom_call.1} parent=11 // pred_region
          _
        $region44: #{tpu_custom_call.1} parent=11 // pred_fallthru
          _
        // Predicated region
        $region45: #{tpu_custom_call.1} parent=11 // pred_check
          %p328 = pneg %p217
        $region46: #{tpu_custom_call.1} parent=11 // pred_check_branch
          %330 = sbr.rel (%p328) target = $region48
        $region47: #{tpu_custom_call.1} parent=11 // pred_region
          %s332 = ssub.s32 1024, 1024
          %333 = vsyncadd [#allocation16], %s332
          %s334 = sshll.u32 [#allocation15], 4
          %s335 = int_to_ptr.vmem [resolvable:$true] %s334
          %340 = dma.hbm_to_vmem [thread:$0]  %s10, 1024, %s335, [#allocation16], 64, 64, 4
        $region48: #{tpu_custom_call.1} parent=11 // pred_fallthru
          _
        // Predicated region
        $region49: #{tpu_custom_call.1} parent=11 // pred_check
          %p341 = pneg %p238
        $region50: #{tpu_custom_call.1} parent=11 // pred_check_branch
          %343 = sbr.rel (%p341) target = $region52
        $region51: #{tpu_custom_call.1} parent=11 // pred_region
          _
        $region52: #{tpu_custom_call.1} parent=11 // pred_fallthru
          _
      $region12: #{tpu_custom_call.1} parent=5 // pred_fallthru
        _
      %p344 = scmp.lt.s32.totalorder %s28, 3
      // Predicated region
      $region53: #{tpu_custom_call.1} parent=5 // pred_check
        %p345 = pneg %p344
      $region54: #{tpu_custom_call.1} parent=5 // pred_check_branch
        %347 = sbr.rel (%p345) target = $region56
      $region55: #{tpu_custom_call.1} parent=5 // pred_region
        _
      $region56: #{tpu_custom_call.1} parent=5 // pred_fallthru
        _
      %p348 = scmp.le.s32.totalorder 1, %s28
      %p349 = scmp.lt.s32.totalorder %s28, 4
      %p350 = pnand %p348, %p349
      %p351 = pneg %p350
      // Predicated region
      $region57: #{tpu_custom_call.1} parent=5 // pred_check
        _
      $region58: #{tpu_custom_call.1} parent=5 // pred_check_branch
        %353 = sbr.rel (%p350) target = $region60
      $region59: #{tpu_custom_call.1} parent=5 // pred_region
        %s354 = ssub.s32 %s28, 1
        // Predicated region
        $region61: #{tpu_custom_call.1} parent=59 // pred_check
          %p355 = pneg %p112
        $region62: #{tpu_custom_call.1} parent=59 // pred_check_branch
          %357 = sbr.rel (%p355) target = $region64
        $region63: #{tpu_custom_call.1} parent=59 // pred_region
          %358 = dma.done [#allocation10], 3072
        $region64: #{tpu_custom_call.1} parent=59 // pred_fallthru
          _
        // Predicated region
        $region65: #{tpu_custom_call.1} parent=59 // pred_check
          %p359 = pneg %p154
        $region66: #{tpu_custom_call.1} parent=59 // pred_check_branch
          %361 = sbr.rel (%p359) target = $region68
        $region67: #{tpu_custom_call.1} parent=59 // pred_region
          %362 = dma.done [#allocation13], 3072
        $region68: #{tpu_custom_call.1} parent=59 // pred_fallthru
          _
        // Predicated region
        $region69: #{tpu_custom_call.1} parent=59 // pred_check
          %p363 = pneg %p175
        $region70: #{tpu_custom_call.1} parent=59 // pred_check_branch
          %365 = sbr.rel (%p363) target = $region72
        $region71: #{tpu_custom_call.1} parent=59 // pred_region
          %366 = dma.done [#allocation13], 1024
        $region72: #{tpu_custom_call.1} parent=59 // pred_fallthru
          _
        // Predicated region
        $region73: #{tpu_custom_call.1} parent=59 // pred_check
          %p367 = pneg %p217
        $region74: #{tpu_custom_call.1} parent=59 // pred_check_branch
          %369 = sbr.rel (%p367) target = $region76
        $region75: #{tpu_custom_call.1} parent=59 // pred_region
          %370 = dma.done [#allocation16], 1024
        $region76: #{tpu_custom_call.1} parent=59 // pred_fallthru
          _
        %p371 = pneg %p49
        %p372 = pneg %p46
        %p373 = pneg %p70
        %p374 = pneg %p67
        %p375 = pneg %p91
        %p376 = pneg %p88
        %p377 = pneg %p112
        %p378 = pneg %p109
        %p379 = pneg %p133
        %p380 = pneg %p130
        %p381 = pneg %p154
        %p382 = pneg %p151
        %p383 = pneg %p175
        %p384 = pneg %p172
        %p385 = pneg %p196
        %p386 = pneg %p193
        %p387 = pneg %p217
        %p388 = pneg %p214
        %p389 = pneg %p238
        %p390 = pneg %p235
        %p391 = pneg %p259
        %p392 = pneg %p256
        %v394 = vld [vmem:[%s6] sm:$0x7]
        %p395 = scmp.eq.s32.totalorder %s33, 0
        // Predicated region
        $region77: #{tpu_custom_call.1} parent=59 // pred_check
          %p396 = pneg %p395
        $region78: #{tpu_custom_call.1} parent=59 // pred_check_branch
          %398 = sbr.rel (%p396) target = $region80
        $region79: #{tpu_custom_call.1} parent=59 // pred_region
          %v399 = vld [vmem:[%s2] sm:$0xf]
          %v400 = vld [vmem:[%s2 + $0x4] sm:$0xf]
          %v401 = vld [vmem:[%s2 + $0x8] sm:$0xf]
          %v402 = vld [vmem:[#allocation9] sm:$0xff]
          %v403 = vld [vmem:[#allocation9 + $0x8] sm:$0xf]
          %v404 = vld [vmem:[#allocation9 + $0xc] sm:$0xff]
          %v405 = vld [vmem:[#allocation9 + $0x14] sm:$0xf]
          %v406 = vld [vmem:[#allocation9 + $0x18] sm:$0xff]
          %v407 = vld [vmem:[#allocation9 + $0x20] sm:$0xf]
          %v408 = vld [vmem:[#allocation9 + $0x24] sm:$0xff]
          %v409 = vld [vmem:[#allocation9 + $0x2c] sm:$0xf]
          %v410 = vld [vmem:[#allocation9 + $0x30] sm:$0xff]
          %v411 = vld [vmem:[#allocation9 + $0x38] sm:$0xf]
          %v412 = vld [vmem:[#allocation9 + $0x3c] sm:$0xff]
          %v413 = vld [vmem:[#allocation9 + $0x44] sm:$0xf]
          %v414 = vld [vmem:[#allocation9 + $0x48] sm:$0xff]
          %v415 = vld [vmem:[#allocation9 + $0x50] sm:$0xf]
          %v416 = vld [vmem:[#allocation9 + $0x54] sm:$0xff]
          %v417 = vld [vmem:[#allocation9 + $0x5c] sm:$0xf]
          %v418 = vld [vmem:[#allocation9 + $0x60] sm:$0xff]
          %v419 = vld [vmem:[#allocation9 + $0x68] sm:$0xf]
          %v420 = vld [vmem:[#allocation9 + $0x6c] sm:$0xff]
          %v421 = vld [vmem:[#allocation9 + $0x74] sm:$0xf]
          %v422 = vld [vmem:[#allocation9 + $0x78] sm:$0xff]
          %v423 = vld [vmem:[#allocation9 + $0x80] sm:$0xf]
          %v424 = vld [vmem:[#allocation9 + $0x84] sm:$0xff]
          %v425 = vld [vmem:[#allocation9 + $0x8c] sm:$0xf]
          %v426 = vld [vmem:[#allocation9 + $0x90] sm:$0xff]
          %v427 = vld [vmem:[#allocation9 + $0x98] sm:$0xf]
          %v428 = vld [vmem:[#allocation9 + $0x9c] sm:$0xff]
          %v429 = vld [vmem:[#allocation9 + $0xa4] sm:$0xf]
          %v430 = vld [vmem:[#allocation9 + $0xa8] sm:$0xff]
          %v431 = vld [vmem:[#allocation9 + $0xb0] sm:$0xf]
          %v432 = vld [vmem:[#allocation9 + $0xb4] sm:$0xff]
          %v433 = vld [vmem:[#allocation9 + $0xbc] sm:$0xf]
          %v435 = vlaneseq
          %v436 = vshrl.u32 %v435, 7
          %v437 = vsub.s32 0, %v436
          %v438 = vrot.slane %v394, %v437
          %v439 = vlaneseq
          %v440 = vshrl.u32 %v439, 7
          %v441 = vsub.s32 1, %v440
          %v442 = vrot.slane %v394, %v441
          %v443 = vlaneseq
          %v444 = vshrl.u32 %v443, 7
          %v445 = vsub.s32 2, %v444
          %v446 = vrot.slane %v394, %v445
          %v453 = vunpack.c.l.b16 %v399
          %v454 = vunpack.c.l.b16 %v400
          %v455 = vunpack.c.l.b16 %v401
          %v456 = vpack.c.b16 %v454, %v453
          %v457 = vpack.c.b16 %v455, %v455
          %v492 = vunpack.c.l.b16 %v402
          %v493 = vunpack.c.h.b16 %v402
          %v494 = vunpack.c.l.b16 %v403
          %v495 = vunpack.c.l.b16 %v404
          %v496 = vunpack.c.h.b16 %v404
          %v497 = vunpack.c.l.b16 %v405
          %v498 = vunpack.c.l.b16 %v406
          %v499 = vunpack.c.h.b16 %v406
          %v500 = vunpack.c.l.b16 %v407
          %v501 = vunpack.c.l.b16 %v408
          %v502 = vunpack.c.h.b16 %v408
          %v503 = vunpack.c.l.b16 %v409
          %v504 = vunpack.c.l.b16 %v410
          %v505 = vunpack.c.h.b16 %v410
          %v506 = vunpack.c.l.b16 %v411
          %v507 = vunpack.c.l.b16 %v412
          %v508 = vunpack.c.h.b16 %v412
          %v509 = vunpack.c.l.b16 %v413
          %v510 = vunpack.c.l.b16 %v414
          %v511 = vunpack.c.h.b16 %v414
          %v512 = vunpack.c.l.b16 %v415
          %v513 = vunpack.c.l.b16 %v416
          %v514 = vunpack.c.h.b16 %v416
          %v515 = vunpack.c.l.b16 %v417
          %v516 = vunpack.c.l.b16 %v418
          %v517 = vunpack.c.h.b16 %v418
          %v518 = vunpack.c.l.b16 %v419
          %v519 = vunpack.c.l.b16 %v420
          %v520 = vunpack.c.h.b16 %v420
          %v521 = vunpack.c.l.b16 %v421
          %v522 = vunpack.c.l.b16 %v422
          %v523 = vunpack.c.h.b16 %v422
          %v524 = vunpack.c.l.b16 %v423
          %v525 = vunpack.c.l.b16 %v424
          %v526 = vunpack.c.h.b16 %v424
          %v527 = vunpack.c.l.b16 %v425
          %v528 = vunpack.c.l.b16 %v426
          %v529 = vunpack.c.h.b16 %v426
          %v530 = vunpack.c.l.b16 %v427
          %v531 = vunpack.c.l.b16 %v428
          %v532 = vunpack.c.h.b16 %v428
          %v533 = vunpack.c.l.b16 %v429
          %v534 = vunpack.c.l.b16 %v430
          %v535 = vunpack.c.h.b16 %v430
          %v536 = vunpack.c.l.b16 %v431
          %v537 = vunpack.c.l.b16 %v432
          %v538 = vunpack.c.h.b16 %v432
          %v539 = vunpack.c.l.b16 %v433
          %v540 = vpack.c.b16 %v495, %v492
          %v541 = vpack.c.b16 %v496, %v493
          %v542 = vpack.c.b16 %v497, %v494
          %v543 = vpack.c.b16 %v501, %v498
          %v544 = vpack.c.b16 %v502, %v499
          %v545 = vpack.c.b16 %v503, %v500
          %v546 = vpack.c.b16 %v507, %v504
          %v547 = vpack.c.b16 %v508, %v505
          %v548 = vpack.c.b16 %v509, %v506
          %v549 = vpack.c.b16 %v513, %v510
          %v550 = vpack.c.b16 %v514, %v511
          %v551 = vpack.c.b16 %v515, %v512
          %v552 = vpack.c.b16 %v519, %v516
          %v553 = vpack.c.b16 %v520, %v517
          %v554 = vpack.c.b16 %v521, %v518
          %v555 = vpack.c.b16 %v525, %v522
          %v556 = vpack.c.b16 %v526, %v523
          %v557 = vpack.c.b16 %v527, %v524
          %v558 = vpack.c.b16 %v531, %v528
          %v559 = vpack.c.b16 %v532, %v529
          %v560 = vpack.c.b16 %v533, %v530
          %v561 = vpack.c.b16 %v537, %v534
          %v562 = vpack.c.b16 %v538, %v535
          %v563 = vpack.c.b16 %v539, %v536
          %588 = vmatprep.subr.bf16.mxu0 %v541
          %589 = vmatpush1.bf16.msra.mxu0 %v540
          %590 = vmatprep.subr.bf16.mxu0 %v544
          %591 = vmatpush1.bf16.msra.mxu0 %v543
          %592 = vmatprep.subr.bf16.mxu0 %v547
          %593 = vmatpush1.bf16.msra.mxu0 %v546
          %594 = vmatprep.subr.bf16.mxu0 %v550
          %595 = vmatpush1.bf16.msra.mxu0 %v549
          %596 = vmatprep.subr.bf16.mxu0 %v553
          %597 = vmatpush1.bf16.msra.mxu0 %v552
          %598 = vmatprep.subr.bf16.mxu0 %v556
          %599 = vmatpush1.bf16.msra.mxu0 %v555
          %600 = vmatprep.subr.bf16.mxu0 %v559
          %601 = vmatpush1.bf16.msra.mxu0 %v558
          %602 = vmatprep.subr.bf16.mxu0 %v562
          %603 = vmatpush1.bf16.msra.mxu0 %v561
          %604 = vmatprep.subr.bf16.mxu0 0
          %605 = vmatpush1.bf16.msra.mxu0 0
          %606 = vmatprep.subr.bf16.mxu0 0
          %607 = vmatpush1.bf16.msra.mxu0 0
          %608 = vmatprep.subr.bf16.mxu0 0
          %609 = vmatpush1.bf16.msra.mxu0 0
          %610 = vmatprep.subr.bf16.mxu0 0
          %611 = vmatpush1.bf16.msra.mxu0 0
          %612 = vmatprep.subr.bf16.mxu0 0
          %613 = vmatpush1.bf16.msra.mxu0 0
          %614 = vmatprep.subr.bf16.mxu0 0
          %615 = vmatpush1.bf16.msra.mxu0 0
          %616 = vmatprep.subr.bf16.mxu0 0
          %617 = vmatpush1.bf16.msra.mxu0 0
          %618 = vmatprep.subr.bf16.mxu0 0
          %619 = vmatpush1.bf16.msra.mxu0 0
          %620 = vmatprep.mubr.bf16.mxu0 0
          %621 = vmatmul.mubr.bf16.gmra.mrb[0].mxu0 %v456
          %v622 = vpop.f32.mrb[0].mxu0
          %v623 = vadd.f32 %v438, %v622
          %v624 = vpop.f32.mrb[0].mxu0
          %v625 = vadd.f32 %v442, %v624
          %v626 = vpop.f32.mrb[0].mxu0
          %v627 = vadd.f32 %v438, %v626
          %v628 = vpop.f32.mrb[0].mxu0
          %v629 = vadd.f32 %v442, %v628
          %630 = vmatprep.mubr.bf16.mxu0 0
          %631 = vmatmul.mubr.bf16.gmra.mrb[0].mxu0 %v457
          %v632 = vpop.f32.mrb[0].mxu0
          %v633 = vadd.f32 %v438, %v632
          %v634 = vpop.f32.mrb[0].mxu0
          %v635 = vadd.f32 %v442, %v634
          %v636 = vpop.f32.mrb[0].mxu0
          %v637 = vpop.f32.mrb[0].mxu0
          %638 = vdwg.mxu0
          %639 = vmatprep.subr.bf16.mxu0 0
          %640 = vmatpush1.bf16.msra.mxu0 %v542
          %641 = vmatprep.subr.bf16.mxu0 0
          %642 = vmatpush1.bf16.msra.mxu0 %v545
          %643 = vmatprep.subr.bf16.mxu0 0
          %644 = vmatpush1.bf16.msra.mxu0 %v548
          %645 = vmatprep.subr.bf16.mxu0 0
          %646 = vmatpush1.bf16.msra.mxu0 %v551
          %647 = vmatprep.subr.bf16.mxu0 0
          %648 = vmatpush1.bf16.msra.mxu0 %v554
          %649 = vmatprep.subr.bf16.mxu0 0
          %650 = vmatpush1.bf16.msra.mxu0 %v557
          %651 = vmatprep.subr.bf16.mxu0 0
          %652 = vmatpush1.bf16.msra.mxu0 %v560
          %653 = vmatprep.subr.bf16.mxu0 0
          %654 = vmatpush1.bf16.msra.mxu0 %v563
          %655 = vmatprep.subr.bf16.mxu0 0
          %656 = vmatpush1.bf16.msra.mxu0 0
          %657 = vmatprep.subr.bf16.mxu0 0
          %658 = vmatpush1.bf16.msra.mxu0 0
          %659 = vmatprep.subr.bf16.mxu0 0
          %660 = vmatpush1.bf16.msra.mxu0 0
          %661 = vmatprep.subr.bf16.mxu0 0
          %662 = vmatpush1.bf16.msra.mxu0 0
          %663 = vmatprep.subr.bf16.mxu0 0
          %664 = vmatpush1.bf16.msra.mxu0 0
          %665 = vmatprep.subr.bf16.mxu0 0
          %666 = vmatpush1.bf16.msra.mxu0 0
          %667 = vmatprep.subr.bf16.mxu0 0
          %668 = vmatpush1.bf16.msra.mxu0 0
          %669 = vmatprep.subr.bf16.mxu0 0
          %670 = vmatpush1.bf16.msra.mxu0 0
          %671 = vmatprep.mubr.bf16.mxu0 0
          %672 = vmatmul.mubr.bf16.gmra.mrb[0].mxu0 %v456
          %v673 = vpop.f32.mrb[0].mxu0
          %v674 = vadd.f32 %v446, %v673
          %v675 = vpop.f32.mrb[0].mxu0
          %v676 = vpop.f32.mrb[0].mxu0
          %v677 = vadd.f32 %v446, %v676
          %v678 = vpop.f32.mrb[0].mxu0
          %679 = vmatprep.mubr.bf16.mxu0 0
          %680 = vmatmul.mubr.bf16.gmra.mrb[0].mxu0 %v457
          %v681 = vpop.f32.mrb[0].mxu0
          %v682 = vadd.f32 %v446, %v681
          %v683 = vpop.f32.mrb[0].mxu0
          %v684 = vpop.f32.mrb[0].mxu0
          %v685 = vpop.f32.mrb[0].mxu0
          %686 = vdwg.mxu0
          %v687 = vxor.u32 %v623, 2147483648
          %v688 = vxor.u32 %v627, 2147483648
          %v689 = vxor.u32 %v633, 2147483648
          %v690 = vmul.f32 %v687, 1.442695
          %v691 = vpow.pop %v690
          %v692 = vmul.f32 %v688, 1.442695
          %v693 = vpow.pop %v692
          %v694 = vmul.f32 %v689, 1.442695
          %v695 = vpow.pop %v694
          %v696 = vadd.f32 %v691, 1.0
          %v697 = vadd.f32 %v693, 1.0
          %v698 = vadd.f32 %v695, 1.0
          %v699 = vrcp.pop %v696
          %v700 = vmul.f32 1.0, %v699
          %v701 = vrcp.pop %v697
          %v702 = vmul.f32 1.0, %v701
          %v703 = vrcp.pop %v698
          %v704 = vmul.f32 1.0, %v703
          %v705 = vxor.u32 %v625, 2147483648
          %v706 = vxor.u32 %v629, 2147483648
          %v707 = vxor.u32 %v635, 2147483648
          %v708 = vmul.f32 %v705, 1.442695
          %v709 = vpow.pop %v708
          %v710 = vmul.f32 %v706, 1.442695
          %v711 = vpow.pop %v710
          %v712 = vmul.f32 %v707, 1.442695
          %v713 = vpow.pop %v712
          %v714 = vadd.f32 %v709, 1.0
          %v715 = vadd.f32 %v711, 1.0
          %v716 = vadd.f32 %v713, 1.0
          %v717 = vrcp.pop %v714
          %v718 = vmul.f32 1.0, %v717
          %v719 = vrcp.pop %v715
          %v720 = vmul.f32 1.0, %v719
          %v721 = vrcp.pop %v716
          %v722 = vmul.f32 1.0, %v721
          %v723 = vtanh.pop %v674
          %v724 = vtanh.pop %v677
          %v725 = vtanh.pop %v682
          %v726 = vmul.f32 %v700, %v723
          %v727 = vmul.f32 %v702, %v724
          %v728 = vmul.f32 %v704, %v725
          %v729 = vld [vmem:[%s3] sm:$0xff]
          %v730 = vld [vmem:[%s3 + $0x8] sm:$0xff]
          %v731 = vld [vmem:[%s3 + $0x10] sm:$0xff]
          %v732 = vadd.f32 %v726, %v729
          %v733 = vadd.f32 %v727, %v730
          %v734 = vadd.f32 %v728, %v731
          %735 = vst [vmem:[#allocation3] sm:$0xff] %v732
          %736 = vst [vmem:[#allocation3 + $0x8] sm:$0xff] %v733
          %737 = vst [vmem:[#allocation3 + $0x10] sm:$0xff] %v734
          %v738 = vtanh.pop %v732
          %v739 = vtanh.pop %v733
          %v740 = vtanh.pop %v734
          %v741 = vmul.f32 %v718, %v738
          %v742 = vmul.f32 %v720, %v739
          %v743 = vmul.f32 %v722, %v740
          %744 = vst [vmem:[#allocation2] sm:$0xff] %v741
          %745 = vst [vmem:[#allocation2 + $0x8] sm:$0xff] %v742
          %746 = vst [vmem:[#allocation2 + $0x10] sm:$0xff] %v743
          %747 = vst [vmem:[#allocation2 + $0x16] sm:$0x1] 0.0
          %748 = vst [vmem:[#allocation3 + $0x16] sm:$0x1] 0.0
        $region80: #{tpu_custom_call.1} parent=59 // pred_fallthru
          _
        %s749 = smul.u32 %s33, 128
        %s750 = sld [smem:[#allocation8 + %s749]]
        %s751 = scalar_lea.vmem [#allocation2], %s750
        %v752 = vld [vmem:[%s751] sm:$0x1]
        %753 = vst [vmem:[#allocation4] sm:$0x1] %v752
        %s754 = scalar_lea.vmem [#allocation3], %s750
        %v755 = vld [vmem:[%s754] sm:$0x1]
        %756 = vst [vmem:[#allocation5] sm:$0x1] %v755
        %s757 = sadd.s32 %s749, 2
        %s758 = sld [smem:[#allocation8 + %s757]]
        %s759 = scalar_lea.vmem [#allocation2], %s758
        %v760 = vld [vmem:[%s759] sm:$0x1]
        %761 = vst [vmem:[#allocation4 + $0x1] sm:$0x1] %v760
        %s762 = scalar_lea.vmem [#allocation3], %s758
        %v763 = vld [vmem:[%s762] sm:$0x1]
        %764 = vst [vmem:[#allocation5 + $0x1] sm:$0x1] %v763
        %s765 = sadd.s32 %s749, 4
        %s766 = sld [smem:[#allocation8 + %s765]]
        %s767 = scalar_lea.vmem [#allocation2], %s766
        %v768 = vld [vmem:[%s767] sm:$0x1]
        %769 = vst [vmem:[#allocation4 + $0x2] sm:$0x1] %v768
        %s770 = scalar_lea.vmem [#allocation3], %s766
        %v771 = vld [vmem:[%s770] sm:$0x1]
        %772 = vst [vmem:[#allocation5 + $0x2] sm:$0x1] %v771
        %s773 = sadd.s32 %s749, 6
        %s774 = sld [smem:[#allocation8 + %s773]]
        %s775 = scalar_lea.vmem [#allocation2], %s774
        %v776 = vld [vmem:[%s775] sm:$0x1]
        %777 = vst [vmem:[#allocation4 + $0x3] sm:$0x1] %v776
        %s778 = scalar_lea.vmem [#allocation3], %s774
        %v779 = vld [vmem:[%s778] sm:$0x1]
        %780 = vst [vmem:[#allocation5 + $0x3] sm:$0x1] %v779
        %s781 = sadd.s32 %s749, 8
        %s782 = sld [smem:[#allocation8 + %s781]]
        %s783 = scalar_lea.vmem [#allocation2], %s782
        %v784 = vld [vmem:[%s783] sm:$0x1]
        %785 = vst [vmem:[#allocation4 + $0x4] sm:$0x1] %v784
        %s786 = scalar_lea.vmem [#allocation3], %s782
        %v787 = vld [vmem:[%s786] sm:$0x1]
        %788 = vst [vmem:[#allocation5 + $0x4] sm:$0x1] %v787
        %s789 = sadd.s32 %s749, 10
        %s790 = sld [smem:[#allocation8 + %s789]]
        %s791 = scalar_lea.vmem [#allocation2], %s790
        %v792 = vld [vmem:[%s791] sm:$0x1]
        %793 = vst [vmem:[#allocation4 + $0x5] sm:$0x1] %v792
        %s794 = scalar_lea.vmem [#allocation3], %s790
        %v795 = vld [vmem:[%s794] sm:$0x1]
        %796 = vst [vmem:[#allocation5 + $0x5] sm:$0x1] %v795
        %s797 = sadd.s32 %s749, 12
        %s798 = sld [smem:[#allocation8 + %s797]]
        %s799 = scalar_lea.vmem [#allocation2], %s798
        %v800 = vld [vmem:[%s799] sm:$0x1]
        %801 = vst [vmem:[#allocation4 + $0x6] sm:$0x1] %v800
        %s802 = scalar_lea.vmem [#allocation3], %s798
        %v803 = vld [vmem:[%s802] sm:$0x1]
        %804 = vst [vmem:[#allocation5 + $0x6] sm:$0x1] %v803
        %s805 = sadd.s32 %s749, 14
        %s806 = sld [smem:[#allocation8 + %s805]]
        %s807 = scalar_lea.vmem [#allocation2], %s806
        %v808 = vld [vmem:[%s807] sm:$0x1]
        %809 = vst [vmem:[#allocation4 + $0x7] sm:$0x1] %v808
        %s810 = scalar_lea.vmem [#allocation3], %s806
        %v811 = vld [vmem:[%s810] sm:$0x1]
        %812 = vst [vmem:[#allocation5 + $0x7] sm:$0x1] %v811
        %s813 = sadd.s32 %s749, 1
        %s814 = sld [smem:[#allocation8 + %s813]]
        %s815 = scalar_lea.vmem [#allocation2], %s814
        %v816 = vld [vmem:[%s815] sm:$0x1]
        %817 = vst [vmem:[#allocation4 + $0x8] sm:$0x1] %v816
        %s818 = scalar_lea.vmem [#allocation3], %s814
        %v819 = vld [vmem:[%s818] sm:$0x1]
        %820 = vst [vmem:[#allocation5 + $0x8] sm:$0x1] %v819
        %s821 = sadd.s32 %s749, 3
        %s822 = sld [smem:[#allocation8 + %s821]]
        %s823 = scalar_lea.vmem [#allocation2], %s822
        %v824 = vld [vmem:[%s823] sm:$0x1]
        %825 = vst [vmem:[#allocation4 + $0x9] sm:$0x1] %v824
        %s826 = scalar_lea.vmem [#allocation3], %s822
        %v827 = vld [vmem:[%s826] sm:$0x1]
        %828 = vst [vmem:[#allocation5 + $0x9] sm:$0x1] %v827
        %s829 = sadd.s32 %s749, 5
        %s830 = sld [smem:[#allocation8 + %s829]]
        %s831 = scalar_lea.vmem [#allocation2], %s830
        %v832 = vld [vmem:[%s831] sm:$0x1]
        %833 = vst [vmem:[#allocation4 + $0xa] sm:$0x1] %v832
        %s834 = scalar_lea.vmem [#allocation3], %s830
        %v835 = vld [vmem:[%s834] sm:$0x1]
        %836 = vst [vmem:[#allocation5 + $0xa] sm:$0x1] %v835
        %s837 = sadd.s32 %s749, 7
        %s838 = sld [smem:[#allocation8 + %s837]]
        %s839 = scalar_lea.vmem [#allocation2], %s838
        %v840 = vld [vmem:[%s839] sm:$0x1]
        %841 = vst [vmem:[#allocation4 + $0xb] sm:$0x1] %v840
        %s842 = scalar_lea.vmem [#allocation3], %s838
        %v843 = vld [vmem:[%s842] sm:$0x1]
        %844 = vst [vmem:[#allocation5 + $0xb] sm:$0x1] %v843
        %s845 = sadd.s32 %s749, 9
        %s846 = sld [smem:[#allocation8 + %s845]]
        %s847 = scalar_lea.vmem [#allocation2], %s846
        %v848 = vld [vmem:[%s847] sm:$0x1]
        %849 = vst [vmem:[#allocation4 + $0xc] sm:$0x1] %v848
        %s850 = scalar_lea.vmem [#allocation3], %s846
        %v851 = vld [vmem:[%s850] sm:$0x1]
        %852 = vst [vmem:[#allocation5 + $0xc] sm:$0x1] %v851
        %s853 = sadd.s32 %s749, 11
        %s854 = sld [smem:[#allocation8 + %s853]]
        %s855 = scalar_lea.vmem [#allocation2], %s854
        %v856 = vld [vmem:[%s855] sm:$0x1]
        %857 = vst [vmem:[#allocation4 + $0xd] sm:$0x1] %v856
        %s858 = scalar_lea.vmem [#allocation3], %s854
        %v859 = vld [vmem:[%s858] sm:$0x1]
        %860 = vst [vmem:[#allocation5 + $0xd] sm:$0x1] %v859
        %s861 = sadd.s32 %s749, 13
        %s862 = sld [smem:[#allocation8 + %s861]]
        %s863 = scalar_lea.vmem [#allocation2], %s862
        %v864 = vld [vmem:[%s863] sm:$0x1]
        %865 = vst [vmem:[#allocation4 + $0xe] sm:$0x1] %v864
        %s866 = scalar_lea.vmem [#allocation3], %s862
        %v867 = vld [vmem:[%s866] sm:$0x1]
        %868 = vst [vmem:[#allocation5 + $0xe] sm:$0x1] %v867
        %s869 = sadd.s32 %s749, 15
        %s870 = sld [smem:[#allocation8 + %s869]]
        %s871 = scalar_lea.vmem [#allocation2], %s870
        %v872 = vld [vmem:[%s871] sm:$0x1]
        %873 = vst [vmem:[#allocation4 + $0xf] sm:$0x1] %v872
        %s874 = scalar_lea.vmem [#allocation3], %s870
        %v875 = vld [vmem:[%s874] sm:$0x1]
        %876 = vst [vmem:[#allocation5 + $0xf] sm:$0x1] %v875
        %v877 = vld [vmem:[#allocation4] sm:$0xff]
        %v878 = vld [vmem:[#allocation4 + $0x8] sm:$0xff]
        %v879 = vld [vmem:[#allocation5] sm:$0xff]
        %v880 = vld [vmem:[#allocation5 + $0x8] sm:$0xff]
        %v881 = vpack.c.bf16 %v878, %v877
        %v882 = vld [vmem:[#allocation14] sm:$0xf]
        %v883 = vld [vmem:[#allocation14 + $0x4] sm:$0xf]
        %v884 = vld [vmem:[#allocation14 + $0x8] sm:$0xf]
        %v885 = vld [vmem:[#allocation14 + $0xc] sm:$0xf]
        %v886 = vld [vmem:[#allocation14 + $0x10] sm:$0xf]
        %v887 = vld [vmem:[#allocation14 + $0x14] sm:$0xf]
        %v888 = vld [vmem:[#allocation14 + $0x18] sm:$0xf]
        %v889 = vld [vmem:[#allocation14 + $0x1c] sm:$0xf]
        %v890 = vld [vmem:[#allocation14 + $0x20] sm:$0xf]
        %v891 = vld [vmem:[#allocation14 + $0x24] sm:$0xf]
        %v892 = vld [vmem:[#allocation14 + $0x28] sm:$0xf]
        %v893 = vld [vmem:[#allocation14 + $0x2c] sm:$0xf]
        %v894 = vld [vmem:[#allocation14 + $0x30] sm:$0xf]
        %v895 = vld [vmem:[#allocation14 + $0x34] sm:$0xf]
        %v896 = vld [vmem:[#allocation14 + $0x38] sm:$0xf]
        %v897 = vld [vmem:[#allocation14 + $0x3c] sm:$0xf]
        %v898 = vld [vmem:[%s9] sm:$0x1]
        %v900 = vlaneseq
        %v901 = vshrl.u32 %v900, 7
        %v902 = vsub.s32 0, %v901
        %v903 = vrot.slane %v898, %v902
        %v921 = vunpack.c.l.b16 %v882
        %v922 = vunpack.c.l.b16 %v883
        %v923 = vunpack.c.l.b16 %v884
        %v924 = vunpack.c.l.b16 %v885
        %v925 = vunpack.c.l.b16 %v886
        %v926 = vunpack.c.l.b16 %v887
        %v927 = vunpack.c.l.b16 %v888
        %v928 = vunpack.c.l.b16 %v889
        %v929 = vunpack.c.l.b16 %v890
        %v930 = vunpack.c.l.b16 %v891
        %v931 = vunpack.c.l.b16 %v892
        %v932 = vunpack.c.l.b16 %v893
        %v933 = vunpack.c.l.b16 %v894
        %v934 = vunpack.c.l.b16 %v895
        %v935 = vunpack.c.l.b16 %v896
        %v936 = vunpack.c.l.b16 %v897
        %v937 = vpack.c.b16 %v922, %v921
        %v938 = vpack.c.b16 %v924, %v923
        %v939 = vpack.c.b16 %v926, %v925
        %v940 = vpack.c.b16 %v928, %v927
        %v941 = vpack.c.b16 %v930, %v929
        %v942 = vpack.c.b16 %v932, %v931
        %v943 = vpack.c.b16 %v934, %v933
        %v944 = vpack.c.b16 %v936, %v935
        %953 = vmatprep.subr.bf16.mxu0 0
        %954 = vmatpush1.bf16.msra.mxu0 %v937
        %955 = vmatprep.subr.bf16.mxu0 0
        %956 = vmatpush1.bf16.msra.mxu0 %v938
        %957 = vmatprep.subr.bf16.mxu0 0
        %958 = vmatpush1.bf16.msra.mxu0 %v939
        %959 = vmatprep.subr.bf16.mxu0 0
        %960 = vmatpush1.bf16.msra.mxu0 %v940
        %961 = vmatprep.subr.bf16.mxu0 0
        %962 = vmatpush1.bf16.msra.mxu0 %v941
        %963 = vmatprep.subr.bf16.mxu0 0
        %964 = vmatpush1.bf16.msra.mxu0 %v942
        %965 = vmatprep.subr.bf16.mxu0 0
        %966 = vmatpush1.bf16.msra.mxu0 %v943
        %967 = vmatprep.subr.bf16.mxu0 0
        %968 = vmatpush1.bf16.msra.mxu0 %v944
        %969 = vmatprep.subr.bf16.mxu0 0
        %970 = vmatpush1.bf16.msra.mxu0 0
        %971 = vmatprep.subr.bf16.mxu0 0
        %972 = vmatpush1.bf16.msra.mxu0 0
        %973 = vmatprep.subr.bf16.mxu0 0
        %974 = vmatpush1.bf16.msra.mxu0 0
        %975 = vmatprep.subr.bf16.mxu0 0
        %976 = vmatpush1.bf16.msra.mxu0 0
        %977 = vmatprep.subr.bf16.mxu0 0
        %978 = vmatpush1.bf16.msra.mxu0 0
        %979 = vmatprep.subr.bf16.mxu0 0
        %980 = vmatpush1.bf16.msra.mxu0 0
        %981 = vmatprep.subr.bf16.mxu0 0
        %982 = vmatpush1.bf16.msra.mxu0 0
        %983 = vmatprep.subr.bf16.mxu0 0
        %984 = vmatpush1.bf16.msra.mxu0 0
        %985 = vmatprep.mubr.bf16.mxu0 0
        %986 = vmatmul.mubr.bf16.gmra.mrb[0].mxu0 %v881
        %v987 = vpop.f32.mrb[0].mxu0
        %v988 = vadd.f32 %v903, %v987
        %v989 = vpop.f32.mrb[0].mxu0
        %v990 = vpop.f32.mrb[0].mxu0
        %v991 = vadd.f32 %v903, %v990
        %v992 = vpop.f32.mrb[0].mxu0
        %993 = vdwg.mxu0
        %v994 = vxor.u32 %v988, 2147483648
        %v995 = vxor.u32 %v991, 2147483648
        %v996 = vmul.f32 %v994, 1.442695
        %v997 = vpow.pop %v996
        %v998 = vmul.f32 %v995, 1.442695
        %v999 = vpow.pop %v998
        %v1000 = vadd.f32 %v997, 1.0
        %v1001 = vadd.f32 %v999, 1.0
        %v1002 = vrcp.pop %v1000
        %v1003 = vmul.f32 1.0, %v1002
        %v1004 = vrcp.pop %v1001
        %v1005 = vmul.f32 1.0, %v1004
        %v1006 = vmul.f32 %v1003, %v879
        %v1007 = vmul.f32 %v1005, %v880
        %v1008 = vadd.f32 %v877, 0.0
        %v1009 = vadd.f32 %v1006, 0.0
        %v1010 = vadd.f32 %v1008, %v878
        %v1011 = vadd.f32 %v1009, %v1007
        %v1012 = vpack.c.bf16 %v1010, %v1010
        %v1013 = vld [vmem:[#allocation12] sm:$0xff]
        %v1014 = vld [vmem:[#allocation12 + $0x8] sm:$0xf]
        %v1015 = vld [vmem:[#allocation12 + $0xc] sm:$0xff]
        %v1016 = vld [vmem:[#allocation12 + $0x14] sm:$0xf]
        %v1017 = vld [vmem:[#allocation12 + $0x18] sm:$0xff]
        %v1018 = vld [vmem:[#allocation12 + $0x20] sm:$0xf]
        %v1019 = vld [vmem:[#allocation12 + $0x24] sm:$0xff]
        %v1020 = vld [vmem:[#allocation12 + $0x2c] sm:$0xf]
        %v1021 = vld [vmem:[#allocation12 + $0x30] sm:$0xff]
        %v1022 = vld [vmem:[#allocation12 + $0x38] sm:$0xf]
        %v1023 = vld [vmem:[#allocation12 + $0x3c] sm:$0xff]
        %v1024 = vld [vmem:[#allocation12 + $0x44] sm:$0xf]
        %v1025 = vld [vmem:[#allocation12 + $0x48] sm:$0xff]
        %v1026 = vld [vmem:[#allocation12 + $0x50] sm:$0xf]
        %v1027 = vld [vmem:[#allocation12 + $0x54] sm:$0xff]
        %v1028 = vld [vmem:[#allocation12 + $0x5c] sm:$0xf]
        %v1029 = vld [vmem:[#allocation12 + $0x60] sm:$0xff]
        %v1030 = vld [vmem:[#allocation12 + $0x68] sm:$0xf]
        %v1031 = vld [vmem:[#allocation12 + $0x6c] sm:$0xff]
        %v1032 = vld [vmem:[#allocation12 + $0x74] sm:$0xf]
        %v1033 = vld [vmem:[#allocation12 + $0x78] sm:$0xff]
        %v1034 = vld [vmem:[#allocation12 + $0x80] sm:$0xf]
        %v1035 = vld [vmem:[#allocation12 + $0x84] sm:$0xff]
        %v1036 = vld [vmem:[#allocation12 + $0x8c] sm:$0xf]
        %v1037 = vld [vmem:[#allocation12 + $0x90] sm:$0xff]
        %v1038 = vld [vmem:[#allocation12 + $0x98] sm:$0xf]
        %v1039 = vld [vmem:[#allocation12 + $0x9c] sm:$0xff]
        %v1040 = vld [vmem:[#allocation12 + $0xa4] sm:$0xf]
        %v1041 = vld [vmem:[#allocation12 + $0xa8] sm:$0xff]
        %v1042 = vld [vmem:[#allocation12 + $0xb0] sm:$0xf]
        %v1043 = vld [vmem:[#allocation12 + $0xb4] sm:$0xff]
        %v1044 = vld [vmem:[#allocation12 + $0xbc] sm:$0xf]
        %v1046 = vlaneseq
        %v1047 = vshrl.u32 %v1046, 7
        %v1048 = vsub.s32 0, %v1047
        %v1049 = vrot.slane %v394, %v1048
        %v1050 = vlaneseq
        %v1051 = vshrl.u32 %v1050, 7
        %v1052 = vsub.s32 1, %v1051
        %v1053 = vrot.slane %v394, %v1052
        %v1054 = vlaneseq
        %v1055 = vshrl.u32 %v1054, 7
        %v1056 = vsub.s32 2, %v1055
        %v1057 = vrot.slane %v394, %v1056
        %v1093 = vunpack.c.l.b16 %v1013
        %v1094 = vunpack.c.h.b16 %v1013
        %v1095 = vunpack.c.l.b16 %v1014
        %v1096 = vunpack.c.l.b16 %v1015
        %v1097 = vunpack.c.h.b16 %v1015
        %v1098 = vunpack.c.l.b16 %v1016
        %v1099 = vunpack.c.l.b16 %v1017
        %v1100 = vunpack.c.h.b16 %v1017
        %v1101 = vunpack.c.l.b16 %v1018
        %v1102 = vunpack.c.l.b16 %v1019
        %v1103 = vunpack.c.h.b16 %v1019
        %v1104 = vunpack.c.l.b16 %v1020
        %v1105 = vunpack.c.l.b16 %v1021
        %v1106 = vunpack.c.h.b16 %v1021
        %v1107 = vunpack.c.l.b16 %v1022
        %v1108 = vunpack.c.l.b16 %v1023
        %v1109 = vunpack.c.h.b16 %v1023
        %v1110 = vunpack.c.l.b16 %v1024
        %v1111 = vunpack.c.l.b16 %v1025
        %v1112 = vunpack.c.h.b16 %v1025
        %v1113 = vunpack.c.l.b16 %v1026
        %v1114 = vunpack.c.l.b16 %v1027
        %v1115 = vunpack.c.h.b16 %v1027
        %v1116 = vunpack.c.l.b16 %v1028
        %v1117 = vunpack.c.l.b16 %v1029
        %v1118 = vunpack.c.h.b16 %v1029
        %v1119 = vunpack.c.l.b16 %v1030
        %v1120 = vunpack.c.l.b16 %v1031
        %v1121 = vunpack.c.h.b16 %v1031
        %v1122 = vunpack.c.l.b16 %v1032
        %v1123 = vunpack.c.l.b16 %v1033
        %v1124 = vunpack.c.h.b16 %v1033
        %v1125 = vunpack.c.l.b16 %v1034
        %v1126 = vunpack.c.l.b16 %v1035
        %v1127 = vunpack.c.h.b16 %v1035
        %v1128 = vunpack.c.l.b16 %v1036
        %v1129 = vunpack.c.l.b16 %v1037
        %v1130 = vunpack.c.h.b16 %v1037
        %v1131 = vunpack.c.l.b16 %v1038
        %v1132 = vunpack.c.l.b16 %v1039
        %v1133 = vunpack.c.h.b16 %v1039
        %v1134 = vunpack.c.l.b16 %v1040
        %v1135 = vunpack.c.l.b16 %v1041
        %v1136 = vunpack.c.h.b16 %v1041
        %v1137 = vunpack.c.l.b16 %v1042
        %v1138 = vunpack.c.l.b16 %v1043
        %v1139 = vunpack.c.h.b16 %v1043
        %v1140 = vunpack.c.l.b16 %v1044
        %v1141 = vpack.c.b16 %v1096, %v1093
        %v1142 = vpack.c.b16 %v1097, %v1094
        %v1143 = vpack.c.b16 %v1098, %v1095
        %v1144 = vpack.c.b16 %v1102, %v1099
        %v1145 = vpack.c.b16 %v1103, %v1100
        %v1146 = vpack.c.b16 %v1104, %v1101
        %v1147 = vpack.c.b16 %v1108, %v1105
        %v1148 = vpack.c.b16 %v1109, %v1106
        %v1149 = vpack.c.b16 %v1110, %v1107
        %v1150 = vpack.c.b16 %v1114, %v1111
        %v1151 = vpack.c.b16 %v1115, %v1112
        %v1152 = vpack.c.b16 %v1116, %v1113
        %v1153 = vpack.c.b16 %v1120, %v1117
        %v1154 = vpack.c.b16 %v1121, %v1118
        %v1155 = vpack.c.b16 %v1122, %v1119
        %v1156 = vpack.c.b16 %v1126, %v1123
        %v1157 = vpack.c.b16 %v1127, %v1124
        %v1158 = vpack.c.b16 %v1128, %v1125
        %v1159 = vpack.c.b16 %v1132, %v1129
        %v1160 = vpack.c.b16 %v1133, %v1130
        %v1161 = vpack.c.b16 %v1134, %v1131
        %v1162 = vpack.c.b16 %v1138, %v1135
        %v1163 = vpack.c.b16 %v1139, %v1136
        %v1164 = vpack.c.b16 %v1140, %v1137
        %1189 = vmatprep.subr.bf16.mxu0 %v1142
        %1190 = vmatpush1.bf16.msra.mxu0 %v1141
        %1191 = vmatprep.subr.bf16.mxu0 %v1145
        %1192 = vmatpush1.bf16.msra.mxu0 %v1144
        %1193 = vmatprep.subr.bf16.mxu0 %v1148
        %1194 = vmatpush1.bf16.msra.mxu0 %v1147
        %1195 = vmatprep.subr.bf16.mxu0 %v1151
        %1196 = vmatpush1.bf16.msra.mxu0 %v1150
        %1197 = vmatprep.subr.bf16.mxu0 %v1154
        %1198 = vmatpush1.bf16.msra.mxu0 %v1153
        %1199 = vmatprep.subr.bf16.mxu0 %v1157
        %1200 = vmatpush1.bf16.msra.mxu0 %v1156
        %1201 = vmatprep.subr.bf16.mxu0 %v1160
        %1202 = vmatpush1.bf16.msra.mxu0 %v1159
        %1203 = vmatprep.subr.bf16.mxu0 %v1163
        %1204 = vmatpush1.bf16.msra.mxu0 %v1162
        %1205 = vmatprep.subr.bf16.mxu0 0
        %1206 = vmatpush1.bf16.msra.mxu0 0
        %1207 = vmatprep.subr.bf16.mxu0 0
        %1208 = vmatpush1.bf16.msra.mxu0 0
        %1209 = vmatprep.subr.bf16.mxu0 0
        %1210 = vmatpush1.bf16.msra.mxu0 0
        %1211 = vmatprep.subr.bf16.mxu0 0
        %1212 = vmatpush1.bf16.msra.mxu0 0
        %1213 = vmatprep.subr.bf16.mxu0 0
        %1214 = vmatpush1.bf16.msra.mxu0 0
        %1215 = vmatprep.subr.bf16.mxu0 0
        %1216 = vmatpush1.bf16.msra.mxu0 0
        %1217 = vmatprep.subr.bf16.mxu0 0
        %1218 = vmatpush1.bf16.msra.mxu0 0
        %1219 = vmatprep.subr.bf16.mxu0 0
        %1220 = vmatpush1.bf16.msra.mxu0 0
        %1221 = vmatprep.mubr.bf16.mxu0 0
        %1222 = vmatmul.mubr.bf16.gmra.mrb[0].mxu0 %v1012
        %v1223 = vpop.f32.mrb[0].mxu0
        %v1224 = vadd.f32 %v1049, %v1223
        %v1225 = vpop.f32.mrb[0].mxu0
        %v1226 = vadd.f32 %v1053, %v1225
        %v1227 = vpop.f32.mrb[0].mxu0
        %v1228 = vpop.f32.mrb[0].mxu0
        %1229 = vdwg.mxu0
        %1230 = vmatprep.subr.bf16.mxu0 0
        %1231 = vmatpush1.bf16.msra.mxu0 %v1143
        %1232 = vmatprep.subr.bf16.mxu0 0
        %1233 = vmatpush1.bf16.msra.mxu0 %v1146
        %1234 = vmatprep.subr.bf16.mxu0 0
        %1235 = vmatpush1.bf16.msra.mxu0 %v1149
        %1236 = vmatprep.subr.bf16.mxu0 0
        %1237 = vmatpush1.bf16.msra.mxu0 %v1152
        %1238 = vmatprep.subr.bf16.mxu0 0
        %1239 = vmatpush1.bf16.msra.mxu0 %v1155
        %1240 = vmatprep.subr.bf16.mxu0 0
        %1241 = vmatpush1.bf16.msra.mxu0 %v1158
        %1242 = vmatprep.subr.bf16.mxu0 0
        %1243 = vmatpush1.bf16.msra.mxu0 %v1161
        %1244 = vmatprep.subr.bf16.mxu0 0
        %1245 = vmatpush1.bf16.msra.mxu0 %v1164
        %1246 = vmatprep.subr.bf16.mxu0 0
        %1247 = vmatpush1.bf16.msra.mxu0 0
        %1248 = vmatprep.subr.bf16.mxu0 0
        %1249 = vmatpush1.bf16.msra.mxu0 0
        %1250 = vmatprep.subr.bf16.mxu0 0
        %1251 = vmatpush1.bf16.msra.mxu0 0
        %1252 = vmatprep.subr.bf16.mxu0 0
        %1253 = vmatpush1.bf16.msra.mxu0 0
        %1254 = vmatprep.subr.bf16.mxu0 0
        %1255 = vmatpush1.bf16.msra.mxu0 0
        %1256 = vmatprep.subr.bf16.mxu0 0
        %1257 = vmatpush1.bf16.msra.mxu0 0
        %1258 = vmatprep.subr.bf16.mxu0 0
        %1259 = vmatpush1.bf16.msra.mxu0 0
        %1260 = vmatprep.subr.bf16.mxu0 0
        %1261 = vmatpush1.bf16.msra.mxu0 0
        %1262 = vmatprep.mubr.bf16.mxu0 0
        %1263 = vmatmul.mubr.bf16.gmra.mrb[0].mxu0 %v1012
        %v1264 = vpop.f32.mrb[0].mxu0
        %v1265 = vadd.f32 %v1057, %v1264
        %v1266 = vpop.f32.mrb[0].mxu0
        %v1267 = vpop.f32.mrb[0].mxu0
        %v1268 = vpop.f32.mrb[0].mxu0
        %1269 = vdwg.mxu0
        %v1270 = vxor.u32 %v1224, 2147483648
        %v1271 = vmul.f32 %v1270, 1.442695
        %v1272 = vpow.pop %v1271
        %v1273 = vadd.f32 %v1272, 1.0
        %v1274 = vrcp.pop %v1273
        %v1275 = vmul.f32 1.0, %v1274
        %v1276 = vxor.u32 %v1226, 2147483648
        %v1277 = vmul.f32 %v1276, 1.442695
        %v1278 = vpow.pop %v1277
        %v1279 = vadd.f32 %v1278, 1.0
        %v1280 = vrcp.pop %v1279
        %v1281 = vmul.f32 1.0, %v1280
        %v1282 = vtanh.pop %v1265
        %v1283 = vmul.f32 %v1275, %v1282
        %v1284 = vadd.f32 %v1283, %v1011
        %v1285 = vtanh.pop %v1284
        %v1286 = vmul.f32 %v1281, %v1285
        %s1287 = sld [smem:[#allocation7 + %s749]]
        %s1288 = scalar_lea.vmem [#allocation2], %s1287
        %1289 = vst [vmem:[%s1288] sm:$0x1] %v1286
        %s1290 = scalar_lea.vmem [#allocation3], %s1287
        %1291 = vst [vmem:[%s1290] sm:$0x1] %v1284
        %s1292 = sld [smem:[#allocation7 + %s813]]
        %s1293 = scalar_lea.vmem [#allocation2], %s1292
        %1294 = vst [vmem:[%s1293 - $0x1] sm:$0x2] %v1286
        %s1295 = scalar_lea.vmem [#allocation3], %s1292
        %1296 = vst [vmem:[%s1295 - $0x1] sm:$0x2] %v1284
        %s1297 = sld [smem:[#allocation7 + %s757]]
        %s1298 = scalar_lea.vmem [#allocation2], %s1297
        %1299 = vst [vmem:[%s1298 - $0x2] sm:$0x4] %v1286
        %s1300 = scalar_lea.vmem [#allocation3], %s1297
        %1301 = vst [vmem:[%s1300 - $0x2] sm:$0x4] %v1284
        %s1302 = sld [smem:[#allocation7 + %s821]]
        %s1303 = scalar_lea.vmem [#allocation2], %s1302
        %1304 = vst [vmem:[%s1303 - $0x3] sm:$0x8] %v1286
        %s1305 = scalar_lea.vmem [#allocation3], %s1302
        %1306 = vst [vmem:[%s1305 - $0x3] sm:$0x8] %v1284
        %s1307 = sld [smem:[#allocation7 + %s765]]
        %s1308 = scalar_lea.vmem [#allocation2], %s1307
        %1309 = vst [vmem:[%s1308 - $0x4] sm:$0x10] %v1286
        %s1310 = scalar_lea.vmem [#allocation3], %s1307
        %1311 = vst [vmem:[%s1310 - $0x4] sm:$0x10] %v1284
        %s1312 = sld [smem:[#allocation7 + %s829]]
        %s1313 = scalar_lea.vmem [#allocation2], %s1312
        %1314 = vst [vmem:[%s1313 - $0x5] sm:$0x20] %v1286
        %s1315 = scalar_lea.vmem [#allocation3], %s1312
        %1316 = vst [vmem:[%s1315 - $0x5] sm:$0x20] %v1284
        %s1317 = sld [smem:[#allocation7 + %s773]]
        %s1318 = scalar_lea.vmem [#allocation2], %s1317
        %1319 = vst [vmem:[%s1318 - $0x6] sm:$0x40] %v1286
        %s1320 = scalar_lea.vmem [#allocation3], %s1317
        %1321 = vst [vmem:[%s1320 - $0x6] sm:$0x40] %v1284
        %s1322 = sld [smem:[#allocation7 + %s837]]
        %s1323 = scalar_lea.vmem [#allocation2], %s1322
        %1324 = vst [vmem:[%s1323 - $0x7] sm:$0x80] %v1286
        %s1325 = scalar_lea.vmem [#allocation3], %s1322
        %1326 = vst [vmem:[%s1325 - $0x7] sm:$0x80] %v1284
        %p1327 = scmp.eq.s32.totalorder %s33, 2
        // Predicated region
        $region81: #{tpu_custom_call.1} parent=59 // pred_check
          %p1328 = pneg %p1327
        $region82: #{tpu_custom_call.1} parent=59 // pred_check_branch
          %1330 = sbr.rel (%p1328) target = $region84
        $region83: #{tpu_custom_call.1} parent=59 // pred_region
          %v1331 = vld [vmem:[#allocation2] sm:$0xff]
          %v1332 = vld [vmem:[#allocation2 + $0x8] sm:$0xff]
          %v1333 = vld [vmem:[#allocation2 + $0x10] sm:$0xff]
          %v1334 = vld [vmem:[%s4] sm:$0xff]
          %v1335 = vld [vmem:[%s4 + $0x8] sm:$0xff]
          %v1336 = vld [vmem:[%s4 + $0x10] sm:$0xff]
          %1338 = vset.pattern.permute.xlu0 0
          %1339 = vperm.xlu0 %1338, %v1334
          %v1340 = vpop.permute.xlu0 %1339
          %1343 = vset.pattern.permute.xlu0 0
          %1344 = vperm.xlu0 %1343, %v1335
          %v1345 = vpop.permute.xlu0 %1344
          %1348 = vset.pattern.permute.xlu0 0
          %1349 = vperm.xlu0 %1348, %v1336
          %v1350 = vpop.permute.xlu0 %1349
          %v1352 = vmul.f32 %v1331, %v1340
          %v1353 = vmul.f32 %v1332, %v1345
          %v1354 = vmul.f32 %v1333, %v1350
          %v1355 = vadd.f32 %v1352, %v1353
          %v1356 = vadd.f32 %v1355, %v1354
          %v1357 = vrot.slane %v1356, 4
          %v1358 = vadd.f32 %v1356, %v1357
          %v1359 = vrot.slane %v1358, 2
          %v1360 = vadd.f32 %v1358, %v1359
          %v1361 = vrot.slane %v1360, 1
          %v1362 = vadd.f32 %v1360, %v1361
          %v1363 = vpack.c.bf16 %v1362, %v1362
          %v1364 = vld [vmem:[#allocation15] sm:$0xf]
          %v1365 = vld [vmem:[#allocation15 + $0x4] sm:$0xf]
          %v1366 = vld [vmem:[#allocation15 + $0x8] sm:$0xf]
          %v1367 = vld [vmem:[#allocation15 + $0xc] sm:$0xf]
          %v1368 = vld [vmem:[#allocation15 + $0x10] sm:$0xf]
          %v1369 = vld [vmem:[#allocation15 + $0x14] sm:$0xf]
          %v1370 = vld [vmem:[#allocation15 + $0x18] sm:$0xf]
          %v1371 = vld [vmem:[#allocation15 + $0x1c] sm:$0xf]
          %v1372 = vld [vmem:[#allocation15 + $0x20] sm:$0xf]
          %v1373 = vld [vmem:[#allocation15 + $0x24] sm:$0xf]
          %v1374 = vld [vmem:[#allocation15 + $0x28] sm:$0xf]
          %v1375 = vld [vmem:[#allocation15 + $0x2c] sm:$0xf]
          %v1376 = vld [vmem:[#allocation15 + $0x30] sm:$0xf]
          %v1377 = vld [vmem:[#allocation15 + $0x34] sm:$0xf]
          %v1378 = vld [vmem:[#allocation15 + $0x38] sm:$0xf]
          %v1379 = vld [vmem:[#allocation15 + $0x3c] sm:$0xf]
          %v1380 = vld [vmem:[%s11] sm:$0x1]
          %v1397 = vunpack.c.l.b16 %v1364
          %v1398 = vunpack.c.l.b16 %v1365
          %v1399 = vunpack.c.l.b16 %v1366
          %v1400 = vunpack.c.l.b16 %v1367
          %v1401 = vunpack.c.l.b16 %v1368
          %v1402 = vunpack.c.l.b16 %v1369
          %v1403 = vunpack.c.l.b16 %v1370
          %v1404 = vunpack.c.l.b16 %v1371
          %v1405 = vunpack.c.l.b16 %v1372
          %v1406 = vunpack.c.l.b16 %v1373
          %v1407 = vunpack.c.l.b16 %v1374
          %v1408 = vunpack.c.l.b16 %v1375
          %v1409 = vunpack.c.l.b16 %v1376
          %v1410 = vunpack.c.l.b16 %v1377
          %v1411 = vunpack.c.l.b16 %v1378
          %v1412 = vunpack.c.l.b16 %v1379
          %v1413 = vpack.c.b16 %v1398, %v1397
          %v1414 = vpack.c.b16 %v1400, %v1399
          %v1415 = vpack.c.b16 %v1402, %v1401
          %v1416 = vpack.c.b16 %v1404, %v1403
          %v1417 = vpack.c.b16 %v1406, %v1405
          %v1418 = vpack.c.b16 %v1408, %v1407
          %v1419 = vpack.c.b16 %v1410, %v1409
          %v1420 = vpack.c.b16 %v1412, %v1411
          %1429 = vmatprep.subr.bf16.mxu0 0
          %1430 = vmatpush1.bf16.msra.mxu0 %v1413
          %1431 = vmatprep.subr.bf16.mxu0 0
          %1432 = vmatpush1.bf16.msra.mxu0 %v1414
          %1433 = vmatprep.subr.bf16.mxu0 0
          %1434 = vmatpush1.bf16.msra.mxu0 %v1415
          %1435 = vmatprep.subr.bf16.mxu0 0
          %1436 = vmatpush1.bf16.msra.mxu0 %v1416
          %1437 = vmatprep.subr.bf16.mxu0 0
          %1438 = vmatpush1.bf16.msra.mxu0 %v1417
          %1439 = vmatprep.subr.bf16.mxu0 0
          %1440 = vmatpush1.bf16.msra.mxu0 %v1418
          %1441 = vmatprep.subr.bf16.mxu0 0
          %1442 = vmatpush1.bf16.msra.mxu0 %v1419
          %1443 = vmatprep.subr.bf16.mxu0 0
          %1444 = vmatpush1.bf16.msra.mxu0 %v1420
          %1445 = vmatprep.subr.bf16.mxu0 0
          %1446 = vmatpush1.bf16.msra.mxu0 0
          %1447 = vmatprep.subr.bf16.mxu0 0
          %1448 = vmatpush1.bf16.msra.mxu0 0
          %1449 = vmatprep.subr.bf16.mxu0 0
          %1450 = vmatpush1.bf16.msra.mxu0 0
          %1451 = vmatprep.subr.bf16.mxu0 0
          %1452 = vmatpush1.bf16.msra.mxu0 0
          %1453 = vmatprep.subr.bf16.mxu0 0
          %1454 = vmatpush1.bf16.msra.mxu0 0
          %1455 = vmatprep.subr.bf16.mxu0 0
          %1456 = vmatpush1.bf16.msra.mxu0 0
          %1457 = vmatprep.subr.bf16.mxu0 0
          %1458 = vmatpush1.bf16.msra.mxu0 0
          %1459 = vmatprep.subr.bf16.mxu0 0
          %1460 = vmatpush1.bf16.msra.mxu0 0
          %1461 = vmatprep.mubr.bf16.mxu0 0
          %1462 = vmatmul.mubr.bf16.gmra.mrb[0].mxu0 %v1363
          %v1463 = vpop.f32.mrb[0].mxu0
          %v1464 = vadd.f32 %v1380, %v1463
          %v1465 = vpop.f32.mrb[0].mxu0
          %v1466 = vpop.f32.mrb[0].mxu0
          %v1467 = vpop.f32.mrb[0].mxu0
          %1468 = vdwg.mxu0
          %vm1469 = vcmask 1040384
          %v1470 = vsel %vm1469, %v1464, -inf
          %1471 = vmax.xlane.f32.xlu0 %v1470
          %v1472 = vpop.xlane.xlu0 %1471
          %v1473 = vsub.f32 %v1464, %v1472
          %v1474 = vmul.f32 %v1473, 1.442695
          %v1475 = vpow.pop %v1474
          %v1476 = vsel %vm1469, %v1475, 0.0
          %1477 = vadd.xlane.f32.xlu0 %v1476
          %v1478 = vpop.xlane.xlu0 %1477
          %v1479 = vlog2.pop %v1478
          %v1480 = vmul.f32 %v1479, 0.6931472
          %v1481 = vsub.f32 %v1473, %v1480
          %1482 = vst [vmem:[#allocation17] sm:$0x1] %v1481
        $region84: #{tpu_custom_call.1} parent=59 // pred_fallthru
          _
        // Predicated region
        $region85: #{tpu_custom_call.1} parent=59 // pred_check
          %p1483 = pneg %p256
        $region86: #{tpu_custom_call.1} parent=59 // pred_check_branch
          %1485 = sbr.rel (%p1483) target = $region88
        $region87: #{tpu_custom_call.1} parent=59 // pred_region
          %s1487 = ssub.s32 16, 16
          %1488 = vsyncadd [#allocation11], %s1487
          %s1490 = sshll.u32 [#allocation17], 4
          %s1491 = int_to_ptr.vmem [resolvable:$true] %s1490
          %1493 = dma.vmem_to_hbm [thread:$0]  %s1491, 16, %s12, [#allocation11]
        $region88: #{tpu_custom_call.1} parent=59 // pred_fallthru
          _
        // Predicated region
        $region89: #{tpu_custom_call.1} parent=59 // pred_check
          %p1494 = pneg %p256
        $region90: #{tpu_custom_call.1} parent=59 // pred_check_branch
          %1496 = sbr.rel (%p1494) target = $region92
        $region91: #{tpu_custom_call.1} parent=59 // pred_region
          %1497 = dma.done [#allocation11], 16
        $region92: #{tpu_custom_call.1} parent=59 // pred_fallthru
          _
      $region60: #{tpu_custom_call.1} parent=5 // pred_fallthru
        _
      %p1498 = scmp.le.s32.totalorder 2, %s28
      // Predicated region
      $region93: #{tpu_custom_call.1} parent=5 // pred_check
        %p1499 = pneg %p1498
      $region94: #{tpu_custom_call.1} parent=5 // pred_check_branch
        %1501 = sbr.rel (%p1499) target = $region96
      $region95: #{tpu_custom_call.1} parent=5 // pred_region
        %s1502 = ssub.s32 %s28, 2
      $region96: #{tpu_custom_call.1} parent=5 // pred_fallthru
        _
    $region6: #{tpu_custom_call.1} parent=1 // loop_footer
      %s32 = sadd.s32 1, %s28
    $region7: #{tpu_custom_call.1} parent=1 // loop_footer_branch
      %27 = sbr.rel target = $region3
    $region8: #{tpu_custom_call.1} parent=1 // loop_exit
      _
    %1503 = vsyncpa [#allocation10], 1
    %s1504 = scalar_lea.sflag [#allocation10], 1
    %1505 = vsyncpa %s1504, 1
    %1506 = vsyncpa [#allocation13], 1
    %1507 = vsyncpa [#allocation16], 1
    %1508 = vsyncpa [#allocation11], 1
    %s1509 = scalar_lea.sflag [#allocation11], 1
    %1510 = vsyncpa %s1509, 1

</llo_original>
